<compile_context>
chip_gen: v7x
topology: tpu7x:2x2x1
jax: 0.10.0
libtpu: 0.0.40
codegen_flags: <defaults>
</compile_context>

<pallas_src>
import functools

import numpy as np
import jax
import jax.numpy as jnp
from jax.experimental import pallas as pl
from jax.experimental.pallas import tpu as pltpu

K = 5      # conv kernel size
C1 = 32    # conv1 out channels
C2 = 64    # conv2 out channels
H = 100    # hidden width of the output MLP
HP = 128   # H zero-padded to a full lane tile


def _round_up(v, m):
    return (v + m - 1) // m * m


def taxonn_kernel(x_ref, w1_ref, b1_ref, sel_ref, w2_ref, b2_ref,
                  w1m_ref, b1m_ref, w2m_ref, b2m_ref,
                  o_ref, acc_ref, *, TB, L, L1, L2, LBP, HB2):
    """One grid step == one (batch tile, stratum).

    x_ref   : (1, TB, LXP, 1)  raw stratum signal, 2+2 zero pad, positions on sublanes
    w1_ref  : (1, K, C1)       conv1 weight, w1[k, c] = torch_w1[c, 0, k]
    b1_ref  : (1, 1, C1)
    sel_ref : (TB*HB2, TB*LBP) 0/1 pool-1 compaction + conv2-pad layout matrix
    w2_ref  : (1, K, C1, C2)   conv2 per-tap weights, w2[k, ci, co] = torch_w2[co, ci, k]
    b2_ref  : (1, 1, C2)
    w1m_ref : (1, L2, C2, HP)  per-(stratum, position) lin1 slabs, bf16, H padded to 128
    b1m_ref : (1, HP)
    w2m_ref : (HP, out)        lin2 weight, pre-transposed, zero rows for padded H
    b2m_ref : (1, out)
    o_ref   : (TB, out)        logits (written at the last stratum)
    acc_ref : (TB, HP)         fused-MLP f32 accumulator (persists across strata)
    """
    s = pl.program_id(1)
    f32 = jnp.float32

    @pl.when(s == 0)
    def _init():
        acc_ref[...] = jnp.zeros_like(acc_ref)

    # ---- Conv1d(1, C1, k=5, p=2) + ReLU : 5 shifted FMAs on the VPU ----------
    xv = x_ref[0]                                   # (TB, LXP, 1)
    w1v = w1_ref[0]                                 # (K, C1)
    h1 = xv[:, 0:L, :] * w1v[0:1, :]
    for k in range(1, K):
        h1 = h1 + xv[:, k:k + L, :] * w1v[k:k + 1, :]
    h1 = jnp.maximum(h1 + b1_ref[0], 0.0)           # (TB, L, C1), >= 0

    # ---- MaxPool1d(2, s=2, p=1) in-register ----------------------------------
    # Post-ReLU zeros stand in for -inf pool padding.  m[p] = max(h1p[p], h1p[p-1]),
    # and pool output j == m[2j] (also handles the half windows at both edges).
    h1p = jnp.concatenate([h1, jnp.zeros((TB, LBP - L, C1), f32)], axis=1)
    prev = jnp.concatenate([jnp.zeros((TB, 1, C1), f32), h1p[:, :LBP - 1, :]],
                           axis=1)
    m = jnp.maximum(h1p, prev)                       # (TB, LBP, C1)
    m2 = m.reshape(TB * LBP, C1)                     # free: LBP % 8 == 0
    # Even-position compaction + 8-aligned, zero-padded per-batch conv2 layout,
    # done as a 0/1 selection matmul on the otherwise idle MXU.
    p1 = jnp.dot(sel_ref[...], m2, preferred_element_type=f32)   # (TB*HB2, C1)

    # ---- Conv1d(C1, C2, k=5, p=2) + ReLU : per-tap matmuls on shifted views --
    n_rows = TB * HB2
    h2 = jnp.dot(p1, w2_ref[0, 0], preferred_element_type=f32)
    for k in range(1, K):
        pk = jnp.concatenate([p1[k:, :], jnp.zeros((k, C1), f32)], axis=0)
        h2 = h2 + jnp.dot(pk, w2_ref[0, k], preferred_element_type=f32)
    h2 = jnp.maximum(h2 + b2_ref[0], 0.0)            # (n_rows, C2)
    h2 = h2.reshape(TB, HB2, C2)                     # free: HB2 % 8 == 0
    del n_rows

    # ---- MaxPool1d(2, s=2, p=1) + Flatten + Linear(F, H), folded -------------
    # acc += sum_j p2_j (TB, C2) @ w1m[s, j] (C2, HP); the torch (C2, L2) flatten
    # order and the stratum concat are baked into w1m at prep time.
    part = jnp.dot(h2[:, 0, :].astype(jnp.bfloat16), w1m_ref[0, 0],
                   preferred_element_type=f32)
    for j in range(1, L2):
        hi = min(2 * j, L1 - 1)                      # right-edge half window
        pj = jnp.maximum(h2[:, 2 * j - 1, :], h2[:, hi, :])
        part = part + jnp.dot(pj.astype(jnp.bfloat16), w1m_ref[0, j],
                              preferred_element_type=f32)
    acc_ref[...] += part

    # ---- finalize: bias + ReLU + Linear(H, out) ------------------------------
    @pl.when(s == pl.num_programs(1) - 1)
    def _done():
        hidden = jnp.maximum(acc_ref[...] + b1m_ref[...], 0.0)
        o_ref[...] = (jnp.dot(hidden, w2m_ref[...],
                              preferred_element_type=f32) + b2m_ref[...])


def prepare_params(params, S):
    """One-time parameter re-layout (model-load time, not per forward)."""
    Hh, F = params["lin1_w"].shape
    assert Hh == H
    L2 = F // (S * C2)
    out_features = params["lin2_w"].shape[0]

    w1 = jnp.transpose(params["conv1_w"][:, :, 0, :], (0, 2, 1))        # (S, K, C1)
    b1 = params["conv1_b"][:, None, :]                                   # (S, 1, C1)
    w2 = jnp.transpose(params["conv2_w"], (0, 3, 2, 1))                  # (S, K, C1, C2)
    b2 = params["conv2_b"][:, None, :]                                   # (S, 1, C2)

    # Fold the per-stratum (C2, L2) flatten order + stratum concat into lin1,
    # reorganised as per-position (C2, H) slabs; pad H -> 128 lanes; store bf16.
    w1m = params["lin1_w"].reshape(H, S, C2, L2)
    w1m = jnp.transpose(w1m, (1, 3, 2, 0))                               # (S, L2, C2, H)
    w1m = jnp.pad(w1m, ((0, 0), (0, 0), (0, 0), (0, HP - H)))
    w1m = w1m.astype(jnp.bfloat16)
    b1m = jnp.pad(params["lin1_b"], (0, HP - H))[None, :]                # (1, HP)
    w2m = jnp.pad(params["lin2_w"].T, ((0, HP - H), (0, 0)))             # (HP, out)
    b2m = params["lin2_b"][None, :]                                      # (1, out)
    return dict(w1=w1, b1=b1, w2=w2, b2=b2, w1m=w1m, b1m=b1m, w2m=w2m,
                b2m=b2m, out_features=out_features)


def _pool1_selection(TB, L1, LBP, HB2):
    """0/1 matrix: p1_stack[b*HB2 + 2 + j] = m_stack[b*LBP + 2j] (else zero rows).

    Zero rows 0..1 / (2+L1).. of each per-batch block give the zero padding the
    conv2 taps need, so every downstream view starts on an 8-aligned block.
    """
    sel = np.zeros((TB * HB2, TB * LBP), np.float32)
    for b in range(TB):
        for j in range(L1):
            sel[b * HB2 + 2 + j, b * LBP + 2 * j] = 1.0
    return jnp.asarray(sel)


def taxonn_forward(x, prep, strat_indices):
    """Pallas implementation of TaxoNN.forward (single fused pallas_call)."""
    S = len(strat_indices)
    B = x.shape[0]
    L = int(strat_indices[0].shape[0])
    L1 = L // 2 + 1
    L2 = L1 // 2 + 1
    OUT = int(prep["out_features"])

    LXP = _round_up(L + 4, 8)        # padded input rows per batch
    LBP = _round_up(L + 1, 8)        # pool-1 max-buffer rows per batch
    HB2 = _round_up(L1 + 4, 8)       # conv2 input block rows per batch (2+L1+pad)

    TB = B if B <= 8 else 8          # batch tile (parallel axis for v7x megacore)
    assert B % TB == 0
    NBT = B // TB

    # glue (pure layout, raw data only): stratify + 2+2 zero pad, positions->sublanes
    idx = jnp.stack(strat_indices, axis=0)                              # (S, L)
    xg = jnp.transpose(x[:, idx], (1, 0, 2))                            # (S, B, L)
    xcol = jnp.pad(xg, ((0, 0), (0, 0), (2, LXP - L - 2)))[..., None]   # (S, B, LXP, 1)

    sel = _pool1_selection(TB, L1, LBP, HB2)

    kernel = functools.partial(taxonn_kernel, TB=TB, L=L, L1=L1, L2=L2,
                               LBP=LBP, HB2=HB2)

    return pl.pallas_call(
        kernel,
        out_shape=jax.ShapeDtypeStruct((B, OUT), jnp.float32),
        grid=(NBT, S),
        in_specs=[
            pl.BlockSpec((1, TB, LXP, 1), lambda bt, s: (s, bt, 0, 0)),
            pl.BlockSpec((1, K, C1), lambda bt, s: (s, 0, 0)),
            pl.BlockSpec((1, 1, C1), lambda bt, s: (s, 0, 0)),
            pl.BlockSpec((TB * HB2, TB * LBP), lambda bt, s: (0, 0)),
            pl.BlockSpec((1, K, C1, C2), lambda bt, s: (s, 0, 0, 0)),
            pl.BlockSpec((1, 1, C2), lambda bt, s: (s, 0, 0)),
            pl.BlockSpec((1, L2, C2, HP), lambda bt, s: (s, 0, 0, 0)),
            pl.BlockSpec((1, HP), lambda bt, s: (0, 0)),
            pl.BlockSpec((HP, OUT), lambda bt, s: (0, 0)),
            pl.BlockSpec((1, OUT), lambda bt, s: (0, 0)),
        ],
        out_specs=pl.BlockSpec((TB, OUT), lambda bt, s: (bt, 0)),
        scratch_shapes=[pltpu.VMEM((TB, HP), jnp.float32)],
        compiler_params=pltpu.CompilerParams(
            dimension_semantics=("parallel", "arbitrary")),
    )(xcol, prep["w1"], prep["b1"], sel, prep["w2"], prep["b2"],
      prep["w1m"], prep["b1m"], prep["w2m"], prep["b2m"])


def reference_forward(x, params, strat_indices):
    """Pure-JAX (XLA) reference matching the PyTorch module exactly."""
    hp = jax.lax.Precision.HIGHEST

    def maxpool(h):  # (B, C, L), MaxPool1d(kernel=2, stride=2, padding=1)
        return jax.lax.reduce_window(h, -jnp.inf, jax.lax.max,
                                     (1, 1, 2), (1, 1, 2),
                                     ((0, 0), (0, 0), (1, 1)))

    outs = []
    for s, idx in enumerate(strat_indices):
        d = x[:, idx][:, None, :]                                     # (B, 1, L)
        h = jax.lax.conv_general_dilated(d, params["conv1_w"][s], (1,), [(2, 2)],
                                         dimension_numbers=("NCH", "OIH", "NCH"),
                                         precision=hp)
        h = jnp.maximum(h + params["conv1_b"][s][None, :, None], 0.0)
        h = maxpool(h)
        h = jax.lax.conv_general_dilated(h, params["conv2_w"][s], (1,), [(2, 2)],
                                         dimension_numbers=("NCH", "OIH", "NCH"),
                                         precision=hp)
        h = jnp.maximum(h + params["conv2_b"][s][None, :, None], 0.0)
        h = maxpool(h)
        outs.append(h.reshape(h.shape[0], -1))                        # Flatten
    f = jnp.concatenate(outs, axis=1)
    h = jnp.maximum(f @ params["lin1_w"].T + params["lin1_b"], 0.0)
    return h @ params["lin2_w"].T + params["lin2_b"]


if __name__ == "__main__":
    # Small, deterministic synthetic setup consistent with the module:
    #   4 strata x 16 leaves each, batch 2, out_features 8.
    B, S, L = 2, 4, 16
    num_leaves = S * L
    out_features = 8
    L1 = L // 2 + 1
    L2 = L1 // 2 + 1
    F = S * C2 * L2            # output_layer_in_features (= 1280 here)

    key = jax.random.PRNGKey(0)
    keys = jax.random.split(key, 10)

    x = jax.random.normal(keys[0], (B, num_leaves), dtype=jnp.float32)

    # TODO(synk): the tree traversal + Spearman-correlation ordering of __init__
    # is host-side data prep (NumPy/SciPy), not forward compute; a fixed
    # permutation of leaf indices split into equal-size strata is used instead.
    perm = jax.random.permutation(keys[1], num_leaves)
    strat_indices = [perm[s * L:(s + 1) * L] for s in range(S)]

    # Deterministic parameters, canonical PyTorch layouts.
    params = {
        "conv1_w": 0.2 * jax.random.normal(keys[2], (S, C1, 1, K), jnp.float32),
        "conv1_b": 0.1 * jax.random.normal(keys[3], (S, C1), jnp.float32),
        "conv2_w": 0.05 * jax.random.normal(keys[4], (S, C2, C1, K), jnp.float32),
        "conv2_b": 0.1 * jax.random.normal(keys[5], (S, C2), jnp.float32),
        "lin1_w": 0.05 * jax.random.normal(keys[6], (H, F), jnp.float32),
        "lin1_b": 0.1 * jax.random.normal(keys[7], (H,), jnp.float32),
        "lin2_w": 0.1 * jax.random.normal(keys[8], (out_features, H), jnp.float32),
        "lin2_b": 0.1 * jax.random.normal(keys[9], (out_features,), jnp.float32),
    }

    prep = prepare_params(params, S)   # one-time weight re-layout

    out = jax.block_until_ready(taxonn_forward(x, prep, strat_indices))
    assert out.shape == (B, out_features)

    ref = jax.block_until_ready(reference_forward(x, params, strat_indices))
    max_err = float(jnp.max(jnp.abs(out - ref)))
    assert max_err < 1e-2, f"mismatch vs reference: max abs err {max_err}"

    # TODO(synk): get_total_l0_reg is a constant 0.0 tensor; no kernel needed.
    print("KERNEL_OK")
</pallas_src>

<mosaic_0001>
module attributes {stable_mosaic.version = 11 : i64} {
  func.func @taxonn_kernel(%arg0: i32, %arg1: i32, %arg2: memref<1x2x24x1xf32, #tpu.memory_space<vmem>>, %arg3: memref<1x5x32xf32, #tpu.memory_space<vmem>>, %arg4: memref<1x1x32xf32, #tpu.memory_space<vmem>>, %arg5: memref<32x48xf32, #tpu.memory_space<vmem>>, %arg6: memref<1x5x32x64xf32, #tpu.memory_space<vmem>>, %arg7: memref<1x1x64xf32, #tpu.memory_space<vmem>>, %arg8: memref<1x5x64x128xbf16, #tpu.memory_space<vmem>>, %arg9: memref<1x128xf32, #tpu.memory_space<vmem>>, %arg10: memref<128x8xf32, #tpu.memory_space<vmem>>, %arg11: memref<1x8xf32, #tpu.memory_space<vmem>>, %arg12: memref<2x8xf32, #tpu.memory_space<vmem>>, %arg13: memref<2x128xf32, #tpu.memory_space<vmem>>) attributes {dimension_semantics = [#tpu.dimension_semantics<parallel>, #tpu.dimension_semantics<arbitrary>], iteration_bounds = array<i64: 1, 4>, scalar_prefetch = 0 : i64, scratch_operands = 1 : i64, tpu.core_type = #tpu.core_type<tc>, window_params = [{transform_indices = @transform_0, window_bounds = array<i64: 1, 2, 24, 1>}, {transform_indices = @transform_1, window_bounds = array<i64: 1, 5, 32>}, {transform_indices = @transform_2, window_bounds = array<i64: 1, 1, 32>}, {pipeline_mode = #tpu.pipeline_mode<synchronous>, transform_indices = @transform_3, window_bounds = array<i64: 32, 48>}, {transform_indices = @transform_4, window_bounds = array<i64: 1, 5, 32, 64>}, {transform_indices = @transform_5, window_bounds = array<i64: 1, 1, 64>}, {transform_indices = @transform_6, window_bounds = array<i64: 1, 5, 64, 128>}, {pipeline_mode = #tpu.pipeline_mode<synchronous>, transform_indices = @transform_7, window_bounds = array<i64: 1, 128>}, {pipeline_mode = #tpu.pipeline_mode<synchronous>, transform_indices = @transform_8, window_bounds = array<i64: 128, 8>}, {pipeline_mode = #tpu.pipeline_mode<synchronous>, transform_indices = @transform_9, window_bounds = array<i64: 1, 8>}, {transform_indices = @transform_10, window_bounds = array<i64: 2, 8>}]} {
    %c0_i32 = arith.constant 0 : i32
    %0 = arith.cmpi eq, %arg1, %c0_i32 : i32
    %1 = arith.extui %0 : i1 to i32
    %c0_i32_0 = arith.constant 0 : i32
    %2 = arith.cmpi ne, %1, %c0_i32_0 : i32
    scf.if %2 {
      %cst_74 = arith.constant 0.000000e+00 : f32
      %147 = vector.broadcast %cst_74 : f32 to vector<2x128xf32>
      %c0_75 = arith.constant 0 : index
      %c0_76 = arith.constant 0 : index
      %148 = vector.load %arg13[%c0_75, %c0_76] : memref<2x128xf32, #tpu.memory_space<vmem>>, vector<2x128xf32>
      tpu.vector_store %arg13[%c0_75, %c0_76], %147 {strides = array<i32>} : memref<2x128xf32, #tpu.memory_space<vmem>>, vector<2x128xf32>,
    } else {
    }
    %c0 = arith.constant 0 : index
    %c0_1 = arith.constant 0 : index
    %c0_2 = arith.constant 0 : index
    %c0_3 = arith.constant 0 : index
    %3 = vector.load %arg2[%c0, %c0_1, %c0_2, %c0_3] : memref<1x2x24x1xf32, #tpu.memory_space<vmem>>, vector<1x2x24x1xf32>
    %4 = vector.shape_cast %3 : vector<1x2x24x1xf32> to vector<2x24x1xf32>
    %c0_4 = arith.constant 0 : index
    %c0_5 = arith.constant 0 : index
    %c0_6 = arith.constant 0 : index
    %5 = vector.load %arg3[%c0_4, %c0_5, %c0_6] : memref<1x5x32xf32, #tpu.memory_space<vmem>>, vector<1x5x32xf32>
    %6 = vector.shape_cast %5 : vector<1x5x32xf32> to vector<5x32xf32>
    %7 = vector.extract_strided_slice %4 {offsets = [0, 0, 0], sizes = [2, 16, 1], strides = [1, 1, 1]} : vector<2x24x1xf32> to vector<2x16x1xf32>
    %8 = vector.extract_strided_slice %6 {offsets = [0, 0], sizes = [1, 32], strides = [1, 1]} : vector<5x32xf32> to vector<1x32xf32>
    %9 = vector.shape_cast %8 : vector<1x32xf32> to vector<1x1x32xf32>
    %10 = vector.broadcast %7 : vector<2x16x1xf32> to vector<2x16x32xf32>
    %11 = vector.broadcast %9 : vector<1x1x32xf32> to vector<2x16x32xf32>
    %12 = arith.mulf %10, %11 : vector<2x16x32xf32>
    %13 = vector.extract_strided_slice %4 {offsets = [0, 1, 0], sizes = [2, 16, 1], strides = [1, 1, 1]} : vector<2x24x1xf32> to vector<2x16x1xf32>
    %14 = vector.extract_strided_slice %6 {offsets = [1, 0], sizes = [1, 32], strides = [1, 1]} : vector<5x32xf32> to vector<1x32xf32>
    %15 = vector.shape_cast %14 : vector<1x32xf32> to vector<1x1x32xf32>
    %16 = vector.broadcast %13 : vector<2x16x1xf32> to vector<2x16x32xf32>
    %17 = vector.broadcast %15 : vector<1x1x32xf32> to vector<2x16x32xf32>
    %18 = arith.mulf %16, %17 : vector<2x16x32xf32>
    %19 = arith.addf %12, %18 : vector<2x16x32xf32>
    %20 = vector.extract_strided_slice %4 {offsets = [0, 2, 0], sizes = [2, 16, 1], strides = [1, 1, 1]} : vector<2x24x1xf32> to vector<2x16x1xf32>
    %21 = vector.extract_strided_slice %6 {offsets = [2, 0], sizes = [1, 32], strides = [1, 1]} : vector<5x32xf32> to vector<1x32xf32>
    %22 = vector.shape_cast %21 : vector<1x32xf32> to vector<1x1x32xf32>
    %23 = vector.broadcast %20 : vector<2x16x1xf32> to vector<2x16x32xf32>
    %24 = vector.broadcast %22 : vector<1x1x32xf32> to vector<2x16x32xf32>
    %25 = arith.mulf %23, %24 : vector<2x16x32xf32>
    %26 = arith.addf %19, %25 : vector<2x16x32xf32>
    %27 = vector.extract_strided_slice %4 {offsets = [0, 3, 0], sizes = [2, 16, 1], strides = [1, 1, 1]} : vector<2x24x1xf32> to vector<2x16x1xf32>
    %28 = vector.extract_strided_slice %6 {offsets = [3, 0], sizes = [1, 32], strides = [1, 1]} : vector<5x32xf32> to vector<1x32xf32>
    %29 = vector.shape_cast %28 : vector<1x32xf32> to vector<1x1x32xf32>
    %30 = vector.broadcast %27 : vector<2x16x1xf32> to vector<2x16x32xf32>
    %31 = vector.broadcast %29 : vector<1x1x32xf32> to vector<2x16x32xf32>
    %32 = arith.mulf %30, %31 : vector<2x16x32xf32>
    %33 = arith.addf %26, %32 : vector<2x16x32xf32>
    %34 = vector.extract_strided_slice %4 {offsets = [0, 4, 0], sizes = [2, 16, 1], strides = [1, 1, 1]} : vector<2x24x1xf32> to vector<2x16x1xf32>
    %35 = vector.extract_strided_slice %6 {offsets = [4, 0], sizes = [1, 32], strides = [1, 1]} : vector<5x32xf32> to vector<1x32xf32>
    %36 = vector.shape_cast %35 : vector<1x32xf32> to vector<1x1x32xf32>
    %37 = vector.broadcast %34 : vector<2x16x1xf32> to vector<2x16x32xf32>
    %38 = vector.broadcast %36 : vector<1x1x32xf32> to vector<2x16x32xf32>
    %39 = arith.mulf %37, %38 : vector<2x16x32xf32>
    %40 = arith.addf %33, %39 : vector<2x16x32xf32>
    %c0_7 = arith.constant 0 : index
    %c0_8 = arith.constant 0 : index
    %c0_9 = arith.constant 0 : index
    %41 = vector.load %arg4[%c0_7, %c0_8, %c0_9] : memref<1x1x32xf32, #tpu.memory_space<vmem>>, vector<1x1x32xf32>
    %42 = vector.shape_cast %41 : vector<1x1x32xf32> to vector<1x32xf32>
    %43 = vector.shape_cast %42 : vector<1x32xf32> to vector<1x1x32xf32>
    %44 = vector.broadcast %43 : vector<1x1x32xf32> to vector<2x16x32xf32>
    %45 = arith.addf %40, %44 : vector<2x16x32xf32>
    %cst = arith.constant 0.000000e+00 : f32
    %46 = vector.broadcast %cst : f32 to vector<2x16x32xf32>
    %47 = arith.maximumf %45, %46 : vector<2x16x32xf32>
    %cst_10 = arith.constant 0.000000e+00 : f32
    %48 = vector.broadcast %cst_10 : f32 to vector<2x8x32xf32>
    %49 = tpu.concatenate %47, %48 in 1 : vector<2x16x32xf32>, vector<2x8x32xf32> -> vector<2x24x32xf32>
    %cst_11 = arith.constant 0.000000e+00 : f32
    %50 = vector.broadcast %cst_11 : f32 to vector<2x1x32xf32>
    %51 = vector.extract_strided_slice %49 {offsets = [0, 0, 0], sizes = [2, 23, 32], strides = [1, 1, 1]} : vector<2x24x32xf32> to vector<2x23x32xf32>
    %52 = tpu.concatenate %50, %51 in 1 : vector<2x1x32xf32>, vector<2x23x32xf32> -> vector<2x24x32xf32>
    %53 = arith.maximumf %49, %52 : vector<2x24x32xf32>
    %54 = vector.shape_cast %53 : vector<2x24x32xf32> to vector<48x32xf32>
    %c0_12 = arith.constant 0 : index
    %c0_13 = arith.constant 0 : index
    %55 = vector.load %arg5[%c0_12, %c0_13] : memref<32x48xf32, #tpu.memory_space<vmem>>, vector<32x48xf32>
    %cst_14 = arith.constant dense<0.000000e+00> : vector<32x32xf32>
    %56 = tpu.matmul %55, %54, %cst_14 {dimension_numbers = #tpu.dot_dimension_numbers<[1], [0], [0], [1], [0, 0, 1, 1], [], []>} : vector<32x48xf32>, vector<48x32xf32>, vector<32x32xf32> -> vector<32x32xf32>
    %c0_15 = arith.constant 0 : index
    %c0_16 = arith.constant 0 : index
    %c0_17 = arith.constant 0 : index
    %c0_18 = arith.constant 0 : index
    %57 = vector.load %arg6[%c0_15, %c0_16, %c0_17, %c0_18] : memref<1x5x32x64xf32, #tpu.memory_space<vmem>>, vector<1x1x32x64xf32>
    %58 = vector.shape_cast %57 : vector<1x1x32x64xf32> to vector<32x64xf32>
    %cst_19 = arith.constant dense<0.000000e+00> : vector<32x64xf32>
    %59 = tpu.matmul %56, %58, %cst_19 {dimension_numbers = #tpu.dot_dimension_numbers<[1], [0], [0], [1], [0, 0, 1, 1], [], []>} : vector<32x32xf32>, vector<32x64xf32>, vector<32x64xf32> -> vector<32x64xf32>
    %60 = vector.extract_strided_slice %56 {offsets = [1, 0], sizes = [31, 32], strides = [1, 1]} : vector<32x32xf32> to vector<31x32xf32>
    %cst_20 = arith.constant 0.000000e+00 : f32
    %61 = vector.broadcast %cst_20 : f32 to vector<1x32xf32>
    %62 = tpu.concatenate %60, %61 in 0 : vector<31x32xf32>, vector<1x32xf32> -> vector<32x32xf32>
    %c0_21 = arith.constant 0 : index
    %c1 = arith.constant 1 : index
    %c0_22 = arith.constant 0 : index
    %c0_23 = arith.constant 0 : index
    %63 = vector.load %arg6[%c0_21, %c1, %c0_22, %c0_23] : memref<1x5x32x64xf32, #tpu.memory_space<vmem>>, vector<1x1x32x64xf32>
    %64 = vector.shape_cast %63 : vector<1x1x32x64xf32> to vector<32x64xf32>
    %cst_24 = arith.constant dense<0.000000e+00> : vector<32x64xf32>
    %65 = tpu.matmul %62, %64, %cst_24 {dimension_numbers = #tpu.dot_dimension_numbers<[1], [0], [0], [1], [0, 0, 1, 1], [], []>} : vector<32x32xf32>, vector<32x64xf32>, vector<32x64xf32> -> vector<32x64xf32>
    %66 = arith.addf %59, %65 : vector<32x64xf32>
    %67 = vector.extract_strided_slice %56 {offsets = [2, 0], sizes = [30, 32], strides = [1, 1]} : vector<32x32xf32> to vector<30x32xf32>
    %cst_25 = arith.constant 0.000000e+00 : f32
    %68 = vector.broadcast %cst_25 : f32 to vector<2x32xf32>
    %69 = tpu.concatenate %67, %68 in 0 : vector<30x32xf32>, vector<2x32xf32> -> vector<32x32xf32>
    %c0_26 = arith.constant 0 : index
    %c2 = arith.constant 2 : index
    %c0_27 = arith.constant 0 : index
    %c0_28 = arith.constant 0 : index
    %70 = vector.load %arg6[%c0_26, %c2, %c0_27, %c0_28] : memref<1x5x32x64xf32, #tpu.memory_space<vmem>>, vector<1x1x32x64xf32>
    %71 = vector.shape_cast %70 : vector<1x1x32x64xf32> to vector<32x64xf32>
    %cst_29 = arith.constant dense<0.000000e+00> : vector<32x64xf32>
    %72 = tpu.matmul %69, %71, %cst_29 {dimension_numbers = #tpu.dot_dimension_numbers<[1], [0], [0], [1], [0, 0, 1, 1], [], []>} : vector<32x32xf32>, vector<32x64xf32>, vector<32x64xf32> -> vector<32x64xf32>
    %73 = arith.addf %66, %72 : vector<32x64xf32>
    %74 = vector.extract_strided_slice %56 {offsets = [3, 0], sizes = [29, 32], strides = [1, 1]} : vector<32x32xf32> to vector<29x32xf32>
    %cst_30 = arith.constant 0.000000e+00 : f32
    %75 = vector.broadcast %cst_30 : f32 to vector<3x32xf32>
    %76 = tpu.concatenate %74, %75 in 0 : vector<29x32xf32>, vector<3x32xf32> -> vector<32x32xf32>
    %c0_31 = arith.constant 0 : index
    %c3 = arith.constant 3 : index
    %c0_32 = arith.constant 0 : index
    %c0_33 = arith.constant 0 : index
    %77 = vector.load %arg6[%c0_31, %c3, %c0_32, %c0_33] : memref<1x5x32x64xf32, #tpu.memory_space<vmem>>, vector<1x1x32x64xf32>
    %78 = vector.shape_cast %77 : vector<1x1x32x64xf32> to vector<32x64xf32>
    %cst_34 = arith.constant dense<0.000000e+00> : vector<32x64xf32>
    %79 = tpu.matmul %76, %78, %cst_34 {dimension_numbers = #tpu.dot_dimension_numbers<[1], [0], [0], [1], [0, 0, 1, 1], [], []>} : vector<32x32xf32>, vector<32x64xf32>, vector<32x64xf32> -> vector<32x64xf32>
    %80 = arith.addf %73, %79 : vector<32x64xf32>
    %81 = vector.extract_strided_slice %56 {offsets = [4, 0], sizes = [28, 32], strides = [1, 1]} : vector<32x32xf32> to vector<28x32xf32>
    %cst_35 = arith.constant 0.000000e+00 : f32
    %82 = vector.broadcast %cst_35 : f32 to vector<4x32xf32>
    %83 = tpu.concatenate %81, %82 in 0 : vector<28x32xf32>, vector<4x32xf32> -> vector<32x32xf32>
    %c0_36 = arith.constant 0 : index
    %c4 = arith.constant 4 : index
    %c0_37 = arith.constant 0 : index
    %c0_38 = arith.constant 0 : index
    %84 = vector.load %arg6[%c0_36, %c4, %c0_37, %c0_38] : memref<1x5x32x64xf32, #tpu.memory_space<vmem>>, vector<1x1x32x64xf32>
    %85 = vector.shape_cast %84 : vector<1x1x32x64xf32> to vector<32x64xf32>
    %cst_39 = arith.constant dense<0.000000e+00> : vector<32x64xf32>
    %86 = tpu.matmul %83, %85, %cst_39 {dimension_numbers = #tpu.dot_dimension_numbers<[1], [0], [0], [1], [0, 0, 1, 1], [], []>} : vector<32x32xf32>, vector<32x64xf32>, vector<32x64xf32> -> vector<32x64xf32>
    %87 = arith.addf %80, %86 : vector<32x64xf32>
    %c0_40 = arith.constant 0 : index
    %c0_41 = arith.constant 0 : index
    %c0_42 = arith.constant 0 : index
    %88 = vector.load %arg7[%c0_40, %c0_41, %c0_42] : memref<1x1x64xf32, #tpu.memory_space<vmem>>, vector<1x1x64xf32>
    %89 = vector.shape_cast %88 : vector<1x1x64xf32> to vector<1x64xf32>
    %90 = vector.broadcast %89 : vector<1x64xf32> to vector<32x64xf32>
    %91 = arith.addf %87, %90 : vector<32x64xf32>
    %cst_43 = arith.constant 0.000000e+00 : f32
    %92 = vector.broadcast %cst_43 : f32 to vector<32x64xf32>
    %93 = arith.maximumf %91, %92 : vector<32x64xf32>
    %94 = vector.shape_cast %93 : vector<32x64xf32> to vector<2x16x64xf32>
    %95 = vector.extract_strided_slice %94 {offsets = [0, 0, 0], sizes = [2, 1, 64], strides = [1, 1, 1]} : vector<2x16x64xf32> to vector<2x1x64xf32>
    %96 = vector.shape_cast %95 : vector<2x1x64xf32> to vector<2x64xf32>
    %97 = arith.truncf %96 : vector<2x64xf32> to vector<2x64xbf16>
    %c0_44 = arith.constant 0 : index
    %c0_45 = arith.constant 0 : index
    %c0_46 = arith.constant 0 : index
    %c0_47 = arith.constant 0 : index
    %98 = vector.load %arg8[%c0_44, %c0_45, %c0_46, %c0_47] : memref<1x5x64x128xbf16, #tpu.memory_space<vmem>>, vector<1x1x64x128xbf16>
    %99 = vector.shape_cast %98 : vector<1x1x64x128xbf16> to vector<64x128xbf16>
    %cst_48 = arith.constant dense<0.000000e+00> : vector<2x128xf32>
    %100 = tpu.matmul %97, %99, %cst_48 {dimension_numbers = #tpu.dot_dimension_numbers<[1], [0], [0], [1], [0, 0, 1, 1], [], []>} : vector<2x64xbf16>, vector<64x128xbf16>, vector<2x128xf32> -> vector<2x128xf32>
    %101 = vector.extract_strided_slice %94 {offsets = [0, 1, 0], sizes = [2, 1, 64], strides = [1, 1, 1]} : vector<2x16x64xf32> to vector<2x1x64xf32>
    %102 = vector.shape_cast %101 : vector<2x1x64xf32> to vector<2x64xf32>
    %103 = vector.extract_strided_slice %94 {offsets = [0, 2, 0], sizes = [2, 1, 64], strides = [1, 1, 1]} : vector<2x16x64xf32> to vector<2x1x64xf32>
    %104 = vector.shape_cast %103 : vector<2x1x64xf32> to vector<2x64xf32>
    %105 = arith.maximumf %102, %104 : vector<2x64xf32>
    %106 = arith.truncf %105 : vector<2x64xf32> to vector<2x64xbf16>
    %c0_49 = arith.constant 0 : index
    %c1_50 = arith.constant 1 : index
    %c0_51 = arith.constant 0 : index
    %c0_52 = arith.constant 0 : index
    %107 = vector.load %arg8[%c0_49, %c1_50, %c0_51, %c0_52] : memref<1x5x64x128xbf16, #tpu.memory_space<vmem>>, vector<1x1x64x128xbf16>
    %108 = vector.shape_cast %107 : vector<1x1x64x128xbf16> to vector<64x128xbf16>
    %cst_53 = arith.constant dense<0.000000e+00> : vector<2x128xf32>
    %109 = tpu.matmul %106, %108, %cst_53 {dimension_numbers = #tpu.dot_dimension_numbers<[1], [0], [0], [1], [0, 0, 1, 1], [], []>} : vector<2x64xbf16>, vector<64x128xbf16>, vector<2x128xf32> -> vector<2x128xf32>
    %110 = arith.addf %100, %109 : vector<2x128xf32>
    %111 = vector.extract_strided_slice %94 {offsets = [0, 3, 0], sizes = [2, 1, 64], strides = [1, 1, 1]} : vector<2x16x64xf32> to vector<2x1x64xf32>
    %112 = vector.shape_cast %111 : vector<2x1x64xf32> to vector<2x64xf32>
    %113 = vector.extract_strided_slice %94 {offsets = [0, 4, 0], sizes = [2, 1, 64], strides = [1, 1, 1]} : vector<2x16x64xf32> to vector<2x1x64xf32>
    %114 = vector.shape_cast %113 : vector<2x1x64xf32> to vector<2x64xf32>
    %115 = arith.maximumf %112, %114 : vector<2x64xf32>
    %116 = arith.truncf %115 : vector<2x64xf32> to vector<2x64xbf16>
    %c0_54 = arith.constant 0 : index
    %c2_55 = arith.constant 2 : index
    %c0_56 = arith.constant 0 : index
    %c0_57 = arith.constant 0 : index
    %117 = vector.load %arg8[%c0_54, %c2_55, %c0_56, %c0_57] : memref<1x5x64x128xbf16, #tpu.memory_space<vmem>>, vector<1x1x64x128xbf16>
    %118 = vector.shape_cast %117 : vector<1x1x64x128xbf16> to vector<64x128xbf16>
    %cst_58 = arith.constant dense<0.000000e+00> : vector<2x128xf32>
    %119 = tpu.matmul %116, %118, %cst_58 {dimension_numbers = #tpu.dot_dimension_numbers<[1], [0], [0], [1], [0, 0, 1, 1], [], []>} : vector<2x64xbf16>, vector<64x128xbf16>, vector<2x128xf32> -> vector<2x128xf32>
    %120 = arith.addf %110, %119 : vector<2x128xf32>
    %121 = vector.extract_strided_slice %94 {offsets = [0, 5, 0], sizes = [2, 1, 64], strides = [1, 1, 1]} : vector<2x16x64xf32> to vector<2x1x64xf32>
    %122 = vector.shape_cast %121 : vector<2x1x64xf32> to vector<2x64xf32>
    %123 = vector.extract_strided_slice %94 {offsets = [0, 6, 0], sizes = [2, 1, 64], strides = [1, 1, 1]} : vector<2x16x64xf32> to vector<2x1x64xf32>
    %124 = vector.shape_cast %123 : vector<2x1x64xf32> to vector<2x64xf32>
    %125 = arith.maximumf %122, %124 : vector<2x64xf32>
    %126 = arith.truncf %125 : vector<2x64xf32> to vector<2x64xbf16>
    %c0_59 = arith.constant 0 : index
    %c3_60 = arith.constant 3 : index
    %c0_61 = arith.constant 0 : index
    %c0_62 = arith.constant 0 : index
    %127 = vector.load %arg8[%c0_59, %c3_60, %c0_61, %c0_62] : memref<1x5x64x128xbf16, #tpu.memory_space<vmem>>, vector<1x1x64x128xbf16>
    %128 = vector.shape_cast %127 : vector<1x1x64x128xbf16> to vector<64x128xbf16>
    %cst_63 = arith.constant dense<0.000000e+00> : vector<2x128xf32>
    %129 = tpu.matmul %126, %128, %cst_63 {dimension_numbers = #tpu.dot_dimension_numbers<[1], [0], [0], [1], [0, 0, 1, 1], [], []>} : vector<2x64xbf16>, vector<64x128xbf16>, vector<2x128xf32> -> vector<2x128xf32>
    %130 = arith.addf %120, %129 : vector<2x128xf32>
    %131 = vector.extract_strided_slice %94 {offsets = [0, 7, 0], sizes = [2, 1, 64], strides = [1, 1, 1]} : vector<2x16x64xf32> to vector<2x1x64xf32>
    %132 = vector.shape_cast %131 : vector<2x1x64xf32> to vector<2x64xf32>
    %133 = vector.extract_strided_slice %94 {offsets = [0, 8, 0], sizes = [2, 1, 64], strides = [1, 1, 1]} : vector<2x16x64xf32> to vector<2x1x64xf32>
    %134 = vector.shape_cast %133 : vector<2x1x64xf32> to vector<2x64xf32>
    %135 = arith.maximumf %132, %134 : vector<2x64xf32>
    %136 = arith.truncf %135 : vector<2x64xf32> to vector<2x64xbf16>
    %c0_64 = arith.constant 0 : index
    %c4_65 = arith.constant 4 : index
    %c0_66 = arith.constant 0 : index
    %c0_67 = arith.constant 0 : index
    %137 = vector.load %arg8[%c0_64, %c4_65, %c0_66, %c0_67] : memref<1x5x64x128xbf16, #tpu.memory_space<vmem>>, vector<1x1x64x128xbf16>
    %138 = vector.shape_cast %137 : vector<1x1x64x128xbf16> to vector<64x128xbf16>
    %cst_68 = arith.constant dense<0.000000e+00> : vector<2x128xf32>
    %139 = tpu.matmul %136, %138, %cst_68 {dimension_numbers = #tpu.dot_dimension_numbers<[1], [0], [0], [1], [0, 0, 1, 1], [], []>} : vector<2x64xbf16>, vector<64x128xbf16>, vector<2x128xf32> -> vector<2x128xf32>
    %140 = arith.addf %130, %139 : vector<2x128xf32>
    %c0_69 = arith.constant 0 : index
    %c0_70 = arith.constant 0 : index
    %141 = vector.load %arg13[%c0_69, %c0_70] : memref<2x128xf32, #tpu.memory_space<vmem>>, vector<2x128xf32>
    %142 = arith.addf %141, %140 : vector<2x128xf32>
    %c0_71 = arith.constant 0 : index
    %c0_72 = arith.constant 0 : index
    %143 = vector.load %arg13[%c0_71, %c0_72] : memref<2x128xf32, #tpu.memory_space<vmem>>, vector<2x128xf32>
    tpu.vector_store %arg13[%c0_71, %c0_72], %142 {strides = array<i32>} : memref<2x128xf32, #tpu.memory_space<vmem>>, vector<2x128xf32>,
    %c3_i32 = arith.constant 3 : i32
    %144 = arith.cmpi eq, %arg1, %c3_i32 : i32
    %145 = arith.extui %144 : i1 to i32
    %c0_i32_73 = arith.constant 0 : i32
    %146 = arith.cmpi ne, %145, %c0_i32_73 : i32
    scf.if %146 {
      %c0_74 = arith.constant 0 : index
      %c0_75 = arith.constant 0 : index
      %147 = vector.load %arg13[%c0_74, %c0_75] : memref<2x128xf32, #tpu.memory_space<vmem>>, vector<2x128xf32>
      %c0_76 = arith.constant 0 : index
      %c0_77 = arith.constant 0 : index
      %148 = vector.load %arg9[%c0_76, %c0_77] : memref<1x128xf32, #tpu.memory_space<vmem>>, vector<1x128xf32>
      %149 = vector.broadcast %148 : vector<1x128xf32> to vector<2x128xf32>
      %150 = arith.addf %147, %149 : vector<2x128xf32>
      %cst_78 = arith.constant 0.000000e+00 : f32
      %151 = vector.broadcast %cst_78 : f32 to vector<2x128xf32>
      %152 = arith.maximumf %150, %151 : vector<2x128xf32>
      %c0_79 = arith.constant 0 : index
      %c0_80 = arith.constant 0 : index
      %153 = vector.load %arg10[%c0_79, %c0_80] : memref<128x8xf32, #tpu.memory_space<vmem>>, vector<128x8xf32>
      %cst_81 = arith.constant dense<0.000000e+00> : vector<2x8xf32>
      %154 = tpu.matmul %152, %153, %cst_81 {dimension_numbers = #tpu.dot_dimension_numbers<[1], [0], [0], [1], [0, 0, 1, 1], [], []>} : vector<2x128xf32>, vector<128x8xf32>, vector<2x8xf32> -> vector<2x8xf32>
      %c0_82 = arith.constant 0 : index
      %c0_83 = arith.constant 0 : index
      %155 = vector.load %arg11[%c0_82, %c0_83] : memref<1x8xf32, #tpu.memory_space<vmem>>, vector<1x8xf32>
      %156 = vector.broadcast %155 : vector<1x8xf32> to vector<2x8xf32>
      %157 = arith.addf %154, %156 : vector<2x8xf32>
      %c0_84 = arith.constant 0 : index
      %c0_85 = arith.constant 0 : index
      %158 = vector.load %arg12[%c0_84, %c0_85] : memref<2x8xf32, #tpu.memory_space<vmem>>, vector<2x8xf32>
      tpu.vector_store %arg12[%c0_84, %c0_85], %157 {strides = array<i32>} : memref<2x8xf32, #tpu.memory_space<vmem>>, vector<2x8xf32>,
    } else {
    }
    return
  }
  func.func @transform_0(%arg0: i32, %arg1: i32) -> (i32, i32, i32, i32) {
    %c0_i32 = arith.constant 0 : i32
    %c0_i32_0 = arith.constant 0 : i32
    %c0_i32_1 = arith.constant 0 : i32
    return %arg1, %arg0, %c0_i32, %c0_i32_0 : i32, i32, i32, i32
  }
  func.func @transform_1(%arg0: i32, %arg1: i32) -> (i32, i32, i32) {
    %c0_i32 = arith.constant 0 : i32
    %c0_i32_0 = arith.constant 0 : i32
    %c0_i32_1 = arith.constant 0 : i32
    return %arg1, %c0_i32, %c0_i32_0 : i32, i32, i32
  }
  func.func @transform_2(%arg0: i32, %arg1: i32) -> (i32, i32, i32) {
    %c0_i32 = arith.constant 0 : i32
    %c0_i32_0 = arith.constant 0 : i32
    %c0_i32_1 = arith.constant 0 : i32
    return %arg1, %c0_i32, %c0_i32_0 : i32, i32, i32
  }
  func.func @transform_3(%arg0: i32, %arg1: i32) -> (i32, i32) {
    %c0_i32 = arith.constant 0 : i32
    %c0_i32_0 = arith.constant 0 : i32
    %c0_i32_1 = arith.constant 0 : i32
    return %c0_i32, %c0_i32_0 : i32, i32
  }
  func.func @transform_4(%arg0: i32, %arg1: i32) -> (i32, i32, i32, i32) {
    %c0_i32 = arith.constant 0 : i32
    %c0_i32_0 = arith.constant 0 : i32
    %c0_i32_1 = arith.constant 0 : i32
    %c0_i32_2 = arith.constant 0 : i32
    return %arg1, %c0_i32, %c0_i32_0, %c0_i32_1 : i32, i32, i32, i32
  }
  func.func @transform_5(%arg0: i32, %arg1: i32) -> (i32, i32, i32) {
    %c0_i32 = arith.constant 0 : i32
    %c0_i32_0 = arith.constant 0 : i32
    %c0_i32_1 = arith.constant 0 : i32
    return %arg1, %c0_i32, %c0_i32_0 : i32, i32, i32
  }
  func.func @transform_6(%arg0: i32, %arg1: i32) -> (i32, i32, i32, i32) {
    %c0_i32 = arith.constant 0 : i32
    %c0_i32_0 = arith.constant 0 : i32
    %c0_i32_1 = arith.constant 0 : i32
    %c0_i32_2 = arith.constant 0 : i32
    return %arg1, %c0_i32, %c0_i32_0, %c0_i32_1 : i32, i32, i32, i32
  }
  func.func @transform_7(%arg0: i32, %arg1: i32) -> (i32, i32) {
    %c0_i32 = arith.constant 0 : i32
    %c0_i32_0 = arith.constant 0 : i32
    %c0_i32_1 = arith.constant 0 : i32
    return %c0_i32, %c0_i32_0 : i32, i32
  }
  func.func @transform_8(%arg0: i32, %arg1: i32) -> (i32, i32) {
    %c0_i32 = arith.constant 0 : i32
    %c0_i32_0 = arith.constant 0 : i32
    %c0_i32_1 = arith.constant 0 : i32
    return %c0_i32, %c0_i32_0 : i32, i32
  }
  func.func @transform_9(%arg0: i32, %arg1: i32) -> (i32, i32) {
    %c0_i32 = arith.constant 0 : i32
    %c0_i32_0 = arith.constant 0 : i32
    %c0_i32_1 = arith.constant 0 : i32
    return %c0_i32, %c0_i32_0 : i32, i32
  }
  func.func @transform_10(%arg0: i32, %arg1: i32) -> (i32, i32) {
    %c0_i32 = arith.constant 0 : i32
    %c0_i32_0 = arith.constant 0 : i32
    return %arg0, %c0_i32 : i32, i32
  }
}

</mosaic_0001>

<llo_original>
// kernel: tpu_custom_call.1
$region0: #{tpu_custom_call.1}
  #allocation0 [shape = 'u32[]', space=smem, size = 0x4, offset = 0x4, fixed_abs, tag = 'smem constant byte address 0x4 - core index']
  #allocation1 [shape = 'u32[144,128]{1,0:T(1,128)}', space=vmem, size = 0x12000, scoped, tag = 'internal scratch']
  #allocation2 [shape = 'f32[2,128]{1,0:T(2,128)}', space=vmem, size = 0x400, scoped, tag = 'scratch operand']
  %s0 = inlined_call_operand.vmem [shape: f32[4,2,24,1], index: 0, kind: input, shape index: {}]
  %s1 = inlined_call_operand.vmem [shape: f32[4,5,32], index: 1, kind: input, shape index: {}]
  %s2 = inlined_call_operand.vmem [shape: f32[4,1,32], index: 2, kind: input, shape index: {}]
  %s3 = inlined_call_operand.vmem [shape: f32[32,48], index: 3, kind: input, shape index: {}]
  %s4 = inlined_call_operand.hbm [shape: f32[4,5,32,64], index: 4, kind: input, shape index: {}]
  %s5 = inlined_call_operand.vmem [shape: f32[4,1,64], index: 5, kind: input, shape index: {}]
  %s6 = inlined_call_operand.hbm [shape: bf16[4,5,64,128], index: 6, kind: input, shape index: {}]
  %s7 = inlined_call_operand.vmem [shape: f32[1,128], index: 7, kind: input, shape index: {}]
  %s8 = inlined_call_operand.vmem [shape: f32[128,8], index: 8, kind: input, shape index: {}]
  %s9 = inlined_call_operand.vmem [shape: f32[1,8], index: 9, kind: input, shape index: {}]
  %s10 = inlined_call_operand.hbm [shape: f32[2,8], index: 10, kind: output, shape index: {}]
  %s11 = sld [smem:[#allocation0]]
  $region89: #{tpu_custom_call.1} parent=0
    _
  %s13 = ssub.s32 1, %s11
  %s14 = scalar_select 0, %s13, %s11
  $region1: #{tpu_custom_call.1} parent=0
    #allocation3 [shape = 'u8[163840]{0}', space=vmem, size = 0x28000, scoped, tag = 'input window, operand 4']
    #allocation4 [shape = 's32[2]{0}', space=sflag, size = 0x8, scoped, tag = 'scoped memory for tpu_custom_call.1']
    #allocation5 [shape = 's32[2]{0}', space=sflag, size = 0x8, scoped, tag = 'scoped memory for tpu_custom_call.1']
    #allocation6 [shape = 'u8[163840]{0}', space=vmem, size = 0x28000, scoped, tag = 'input window, operand 6']
    #allocation7 [shape = 's32[2]{0}', space=sflag, size = 0x8, scoped, tag = 'scoped memory for tpu_custom_call.1']
    #allocation8 [shape = 'u8[1024]{0}', space=vmem, size = 0x400, scoped, tag = 'output window, operand 0, single buffered']
    %15 = vsyncpa [#allocation4], 0
    %s16 = scalar_lea.sflag [#allocation4], 1
    %17 = vsyncpa %s16, 0
    %18 = vsyncpa [#allocation7], 0
    %s19 = scalar_lea.sflag [#allocation7], 1
    %20 = vsyncpa %s19, 0
    %21 = vsyncpa [#allocation5], 0
    loop: start=0, step=1, limit=6
    $region2: #{tpu_custom_call.1} parent=1 // loop_pre_header
      _
    $region3: #{tpu_custom_call.1} parent=1 // loop_header
      %s23 = sphi 0, %s27
      %p24 = scmp.ge.s32.totalorder %s23, 6
      %s30 = sphi 0, %s42
      %s31 = sphi 0, %s38
      %s32 = sphi 0, %s30
      %s33 = sphi 0, %s31
      %s34 = sphi 0, %s32
      %s35 = sphi 0, %s33
      %s47 = sphi 0, %s49
      %s50 = sphi 0, %s47
      %s51 = sphi 0, %s50
      %s67 = sphi 0, %s51
      %s73 = sphi 0, %s75
      %s76 = sphi 0, %s73
      %s77 = sphi 0, %s76
      %s93 = sphi 0, %s77
      %s99 = sphi 0, %s101
      %s102 = sphi 0, %s99
      %s103 = sphi 0, %s102
      %s119 = sphi 0, %s103
      %s123 = sphi 0, %s123
      %s125 = sphi 0, %s123
      %s126 = sphi 0, %s125
      %s140 = sphi 0, %s126
      %s146 = sphi 0, %s148
      %s149 = sphi 0, %s146
      %s150 = sphi 0, %s149
      %s166 = sphi 0, %s150
      %s172 = sphi 0, %s174
      %s175 = sphi 0, %s172
      %s176 = sphi 0, %s175
      %s192 = sphi 0, %s176
      %s198 = sphi 0, %s200
      %s201 = sphi 0, %s198
      %s202 = sphi 0, %s201
      %s218 = sphi 0, %s202
      %s222 = sphi 0, %s222
      %s224 = sphi 0, %s222
      %s225 = sphi 0, %s224
      %s239 = sphi 0, %s225
      %s243 = sphi 0, %s243
      %s245 = sphi 0, %s243
      %s246 = sphi 0, %s245
      %s260 = sphi 0, %s246
      %s264 = sphi 0, %s264
      %s266 = sphi 0, %s264
      %s267 = sphi 0, %s266
      %s281 = sphi 0, %s267
      %s287 = sphi 0, %s289
      %s290 = sphi 0, %s287
      %s291 = sphi 0, %s290
      %s307 = sphi 0, %s291
    $region4: #{tpu_custom_call.1} parent=1 // loop_header_branch
      %26 = sbr.rel (%p24) target = $region8
    $region5: #{tpu_custom_call.1} parent=1 // loop_body
      %s28 = ssub.s32 %s23, 1
      %s29 = ssub.s32 %s23, 2
      %s36 = sadd.s32 1, %s31
      %p37 = scmp.ge.s32.totalorder %s36, 4
      %s38 = scalar_select %p37, 0, %s36
      %s39 = sadd.s32 1, %s30
      %s40 = scalar_select %p37, %s39, %s30
      %p41 = scmp.ge.s32.totalorder %s40, 1
      %s42 = scalar_select %p41, 0, %s40
      %s43 = ssub.s32 %s31, %s38
      %s44 = ssub.s32 %s30, %s42
      %s45 = sor.u32 %s43, %s44
      %p46 = scmp.eq.s32.totalorder %s45, 0
      %s48 = sadd.s32 %s47, 1
      %s49 = scalar_select %p46, %s47, %s48
      %p52 = pneg %p46
      %p53 = scmp.eq.s32.totalorder %s23, 3
      %p54 = por %p52, %p53
      %p55 = scmp.ne.s32.totalorder %s47, %s50
      %p56 = scmp.eq.s32.totalorder %s23, 0
      %p57 = por %p55, %p56
      %p58 = scmp.ne.s32.totalorder %s47, %s50
      %p59 = scmp.eq.s32.totalorder %s28, 3
      %p60 = por %p58, %p59
      %p61 = scmp.ne.s32.totalorder %s50, %s51
      %p62 = scmp.eq.s32.totalorder %s28, 0
      %p63 = por %p61, %p62
      %p64 = scmp.ne.s32.totalorder %s50, %s51
      %p65 = scmp.eq.s32.totalorder %s29, 3
      %p66 = por %p64, %p65
      %p68 = scmp.ne.s32.totalorder %s51, %s67
      %p69 = scmp.eq.s32.totalorder %s29, 0
      %p70 = por %p68, %p69
      %s71 = ssub.s32 %s31, %s38
      %p72 = scmp.eq.s32.totalorder %s71, 0
      %s74 = sadd.s32 %s73, 1
      %s75 = scalar_select %p72, %s73, %s74
      %p78 = pneg %p72
      %p79 = scmp.eq.s32.totalorder %s23, 3
      %p80 = por %p78, %p79
      %p81 = scmp.ne.s32.totalorder %s73, %s76
      %p82 = scmp.eq.s32.totalorder %s23, 0
      %p83 = por %p81, %p82
      %p84 = scmp.ne.s32.totalorder %s73, %s76
      %p85 = scmp.eq.s32.totalorder %s28, 3
      %p86 = por %p84, %p85
      %p87 = scmp.ne.s32.totalorder %s76, %s77
      %p88 = scmp.eq.s32.totalorder %s28, 0
      %p89 = por %p87, %p88
      %p90 = scmp.ne.s32.totalorder %s76, %s77
      %p91 = scmp.eq.s32.totalorder %s29, 3
      %p92 = por %p90, %p91
      %p94 = scmp.ne.s32.totalorder %s77, %s93
      %p95 = scmp.eq.s32.totalorder %s29, 0
      %p96 = por %p94, %p95
      %s97 = ssub.s32 %s31, %s38
      %p98 = scmp.eq.s32.totalorder %s97, 0
      %s100 = sadd.s32 %s99, 1
      %s101 = scalar_select %p98, %s99, %s100
      %p104 = pneg %p98
      %p105 = scmp.eq.s32.totalorder %s23, 3
      %p106 = por %p104, %p105
      %p107 = scmp.ne.s32.totalorder %s99, %s102
      %p108 = scmp.eq.s32.totalorder %s23, 0
      %p109 = por %p107, %p108
      %p110 = scmp.ne.s32.totalorder %s99, %s102
      %p111 = scmp.eq.s32.totalorder %s28, 3
      %p112 = por %p110, %p111
      %p113 = scmp.ne.s32.totalorder %s102, %s103
      %p114 = scmp.eq.s32.totalorder %s28, 0
      %p115 = por %p113, %p114
      %p116 = scmp.ne.s32.totalorder %s102, %s103
      %p117 = scmp.eq.s32.totalorder %s29, 3
      %p118 = por %p116, %p117
      %p120 = scmp.ne.s32.totalorder %s103, %s119
      %p121 = scmp.eq.s32.totalorder %s29, 0
      %p122 = por %p120, %p121
      %s124 = sadd.s32 %s123, 1
      %p127 = scmp.eq.s32.totalorder %s23, 3
      %p128 = scmp.ne.s32.totalorder %s123, %s125
      %p129 = scmp.eq.s32.totalorder %s23, 0
      %p130 = por %p128, %p129
      %p131 = scmp.ne.s32.totalorder %s123, %s125
      %p132 = scmp.eq.s32.totalorder %s28, 3
      %p133 = por %p131, %p132
      %p134 = scmp.ne.s32.totalorder %s125, %s126
      %p135 = scmp.eq.s32.totalorder %s28, 0
      %p136 = por %p134, %p135
      %p137 = scmp.ne.s32.totalorder %s125, %s126
      %p138 = scmp.eq.s32.totalorder %s29, 3
      %p139 = por %p137, %p138
      %p141 = scmp.ne.s32.totalorder %s126, %s140
      %p142 = scmp.eq.s32.totalorder %s29, 0
      %p143 = por %p141, %p142
      %s144 = ssub.s32 %s31, %s38
      %p145 = scmp.eq.s32.totalorder %s144, 0
      %s147 = sadd.s32 %s146, 1
      %s148 = scalar_select %p145, %s146, %s147
      %p151 = pneg %p145
      %p152 = scmp.eq.s32.totalorder %s23, 3
      %p153 = por %p151, %p152
      %p154 = scmp.ne.s32.totalorder %s146, %s149
      %p155 = scmp.eq.s32.totalorder %s23, 0
      %p156 = por %p154, %p155
      %p157 = scmp.ne.s32.totalorder %s146, %s149
      %p158 = scmp.eq.s32.totalorder %s28, 3
      %p159 = por %p157, %p158
      %p160 = scmp.ne.s32.totalorder %s149, %s150
      %p161 = scmp.eq.s32.totalorder %s28, 0
      %p162 = por %p160, %p161
      %p163 = scmp.ne.s32.totalorder %s149, %s150
      %p164 = scmp.eq.s32.totalorder %s29, 3
      %p165 = por %p163, %p164
      %p167 = scmp.ne.s32.totalorder %s150, %s166
      %p168 = scmp.eq.s32.totalorder %s29, 0
      %p169 = por %p167, %p168
      %s170 = ssub.s32 %s31, %s38
      %p171 = scmp.eq.s32.totalorder %s170, 0
      %s173 = sadd.s32 %s172, 1
      %s174 = scalar_select %p171, %s172, %s173
      %p177 = pneg %p171
      %p178 = scmp.eq.s32.totalorder %s23, 3
      %p179 = por %p177, %p178
      %p180 = scmp.ne.s32.totalorder %s172, %s175
      %p181 = scmp.eq.s32.totalorder %s23, 0
      %p182 = por %p180, %p181
      %p183 = scmp.ne.s32.totalorder %s172, %s175
      %p184 = scmp.eq.s32.totalorder %s28, 3
      %p185 = por %p183, %p184
      %p186 = scmp.ne.s32.totalorder %s175, %s176
      %p187 = scmp.eq.s32.totalorder %s28, 0
      %p188 = por %p186, %p187
      %p189 = scmp.ne.s32.totalorder %s175, %s176
      %p190 = scmp.eq.s32.totalorder %s29, 3
      %p191 = por %p189, %p190
      %p193 = scmp.ne.s32.totalorder %s176, %s192
      %p194 = scmp.eq.s32.totalorder %s29, 0
      %p195 = por %p193, %p194
      %s196 = ssub.s32 %s31, %s38
      %p197 = scmp.eq.s32.totalorder %s196, 0
      %s199 = sadd.s32 %s198, 1
      %s200 = scalar_select %p197, %s198, %s199
      %p203 = pneg %p197
      %p204 = scmp.eq.s32.totalorder %s23, 3
      %p205 = por %p203, %p204
      %p206 = scmp.ne.s32.totalorder %s198, %s201
      %p207 = scmp.eq.s32.totalorder %s23, 0
      %p208 = por %p206, %p207
      %p209 = scmp.ne.s32.totalorder %s198, %s201
      %p210 = scmp.eq.s32.totalorder %s28, 3
      %p211 = por %p209, %p210
      %p212 = scmp.ne.s32.totalorder %s201, %s202
      %p213 = scmp.eq.s32.totalorder %s28, 0
      %p214 = por %p212, %p213
      %p215 = scmp.ne.s32.totalorder %s201, %s202
      %p216 = scmp.eq.s32.totalorder %s29, 3
      %p217 = por %p215, %p216
      %p219 = scmp.ne.s32.totalorder %s202, %s218
      %p220 = scmp.eq.s32.totalorder %s29, 0
      %p221 = por %p219, %p220
      %s223 = sadd.s32 %s222, 1
      %p226 = scmp.eq.s32.totalorder %s23, 3
      %p227 = scmp.ne.s32.totalorder %s222, %s224
      %p228 = scmp.eq.s32.totalorder %s23, 0
      %p229 = por %p227, %p228
      %p230 = scmp.ne.s32.totalorder %s222, %s224
      %p231 = scmp.eq.s32.totalorder %s28, 3
      %p232 = por %p230, %p231
      %p233 = scmp.ne.s32.totalorder %s224, %s225
      %p234 = scmp.eq.s32.totalorder %s28, 0
      %p235 = por %p233, %p234
      %p236 = scmp.ne.s32.totalorder %s224, %s225
      %p237 = scmp.eq.s32.totalorder %s29, 3
      %p238 = por %p236, %p237
      %p240 = scmp.ne.s32.totalorder %s225, %s239
      %p241 = scmp.eq.s32.totalorder %s29, 0
      %p242 = por %p240, %p241
      %s244 = sadd.s32 %s243, 1
      %p247 = scmp.eq.s32.totalorder %s23, 3
      %p248 = scmp.ne.s32.totalorder %s243, %s245
      %p249 = scmp.eq.s32.totalorder %s23, 0
      %p250 = por %p248, %p249
      %p251 = scmp.ne.s32.totalorder %s243, %s245
      %p252 = scmp.eq.s32.totalorder %s28, 3
      %p253 = por %p251, %p252
      %p254 = scmp.ne.s32.totalorder %s245, %s246
      %p255 = scmp.eq.s32.totalorder %s28, 0
      %p256 = por %p254, %p255
      %p257 = scmp.ne.s32.totalorder %s245, %s246
      %p258 = scmp.eq.s32.totalorder %s29, 3
      %p259 = por %p257, %p258
      %p261 = scmp.ne.s32.totalorder %s246, %s260
      %p262 = scmp.eq.s32.totalorder %s29, 0
      %p263 = por %p261, %p262
      %s265 = sadd.s32 %s264, 1
      %p268 = scmp.eq.s32.totalorder %s23, 3
      %p269 = scmp.ne.s32.totalorder %s264, %s266
      %p270 = scmp.eq.s32.totalorder %s23, 0
      %p271 = por %p269, %p270
      %p272 = scmp.ne.s32.totalorder %s264, %s266
      %p273 = scmp.eq.s32.totalorder %s28, 3
      %p274 = por %p272, %p273
      %p275 = scmp.ne.s32.totalorder %s266, %s267
      %p276 = scmp.eq.s32.totalorder %s28, 0
      %p277 = por %p275, %p276
      %p278 = scmp.ne.s32.totalorder %s266, %s267
      %p279 = scmp.eq.s32.totalorder %s29, 3
      %p280 = por %p278, %p279
      %p282 = scmp.ne.s32.totalorder %s267, %s281
      %p283 = scmp.eq.s32.totalorder %s29, 0
      %p284 = por %p282, %p283
      %s285 = ssub.s32 %s30, %s42
      %p286 = scmp.eq.s32.totalorder %s285, 0
      %s288 = sadd.s32 %s287, 1
      %s289 = scalar_select %p286, %s287, %s288
      %p292 = pneg %p286
      %p293 = scmp.eq.s32.totalorder %s23, 3
      %p294 = por %p292, %p293
      %p295 = scmp.ne.s32.totalorder %s287, %s290
      %p296 = scmp.eq.s32.totalorder %s23, 0
      %p297 = por %p295, %p296
      %p298 = scmp.ne.s32.totalorder %s287, %s290
      %p299 = scmp.eq.s32.totalorder %s28, 3
      %p300 = por %p298, %p299
      %p301 = scmp.ne.s32.totalorder %s290, %s291
      %p302 = scmp.eq.s32.totalorder %s28, 0
      %p303 = por %p301, %p302
      %p304 = scmp.ne.s32.totalorder %s290, %s291
      %p305 = scmp.eq.s32.totalorder %s29, 3
      %p306 = por %p304, %p305
      %p308 = scmp.ne.s32.totalorder %s291, %s307
      %p309 = scmp.eq.s32.totalorder %s29, 0
      %p310 = por %p308, %p309
      %p311 = scmp.le.s32.totalorder 1, %s23
      %p312 = scmp.lt.s32.totalorder %s23, 5
      %p313 = pnand %p311, %p312
      %p314 = pneg %p313
      // Predicated region
      $region9: #{tpu_custom_call.1} parent=5 // pred_check
        _
      $region10: #{tpu_custom_call.1} parent=5 // pred_check_branch
        %316 = sbr.rel (%p313) target = $region12
      $region11: #{tpu_custom_call.1} parent=5 // pred_region
        %s317 = ssub.s32 %s23, 1
        // Predicated region
        $region13: #{tpu_custom_call.1} parent=11 // pred_check
          %p318 = pneg %p136
        $region14: #{tpu_custom_call.1} parent=11 // pred_check_branch
          %320 = sbr.rel (%p318) target = $region16
        $region15: #{tpu_custom_call.1} parent=11 // pred_region
          _
        $region16: #{tpu_custom_call.1} parent=11 // pred_fallthru
          _
        // Predicated region
        $region17: #{tpu_custom_call.1} parent=11 // pred_check
          %p321 = pneg %p235
        $region18: #{tpu_custom_call.1} parent=11 // pred_check_branch
          %323 = sbr.rel (%p321) target = $region20
        $region19: #{tpu_custom_call.1} parent=11 // pred_region
          _
        $region20: #{tpu_custom_call.1} parent=11 // pred_fallthru
          _
        // Predicated region
        $region21: #{tpu_custom_call.1} parent=11 // pred_check
          %p324 = pneg %p256
        $region22: #{tpu_custom_call.1} parent=11 // pred_check_branch
          %326 = sbr.rel (%p324) target = $region24
        $region23: #{tpu_custom_call.1} parent=11 // pred_region
          _
        $region24: #{tpu_custom_call.1} parent=11 // pred_fallthru
          _
        // Predicated region
        $region25: #{tpu_custom_call.1} parent=11 // pred_check
          %p327 = pneg %p277
        $region26: #{tpu_custom_call.1} parent=11 // pred_check_branch
          %329 = sbr.rel (%p327) target = $region28
        $region27: #{tpu_custom_call.1} parent=11 // pred_region
          _
        $region28: #{tpu_custom_call.1} parent=11 // pred_fallthru
          _
      $region12: #{tpu_custom_call.1} parent=5 // pred_fallthru
        _
      %p330 = scmp.lt.s32.totalorder %s23, 4
      // Predicated region
      $region29: #{tpu_custom_call.1} parent=5 // pred_check
        %p331 = pneg %p330
      $region30: #{tpu_custom_call.1} parent=5 // pred_check_branch
        %333 = sbr.rel (%p331) target = $region32
      $region31: #{tpu_custom_call.1} parent=5 // pred_region
        // Predicated region
        $region33: #{tpu_custom_call.1} parent=31 // pred_check
          %p334 = pneg %p57
        $region34: #{tpu_custom_call.1} parent=31 // pred_check_branch
          %336 = sbr.rel (%p334) target = $region36
        $region35: #{tpu_custom_call.1} parent=31 // pred_region
          %s337 = smul.u32 2, %s30
          %p338 = scmp.lt.s32.totalorder %s31, 3
          %s339 = scalar_select %p338, %s31, 3
          %p340 = scmp.lt.s32.totalorder %s337, 1
          %s341 = scalar_select %p340, %s337, 1
          %s342 = smul.addr %s341, 3
          %s343 = smul.addr %s339, 6
          %s344 = sadd.s32 %s342, %s343
          %s345 = smul.addr %s344, 8
          %s346 = scalar_lea.vmem %s0, %s345
          %s347 = smul.u32 2, %s30
        $region36: #{tpu_custom_call.1} parent=31 // pred_fallthru
          _
        // Predicated region
        $region37: #{tpu_custom_call.1} parent=31 // pred_check
          %p348 = pneg %p83
        $region38: #{tpu_custom_call.1} parent=31 // pred_check_branch
          %350 = sbr.rel (%p348) target = $region40
        $region39: #{tpu_custom_call.1} parent=31 // pred_region
          %p351 = scmp.lt.s32.totalorder %s31, 3
          %s352 = scalar_select %p351, %s31, 3
          %s353 = smul.addr %s352, 8
          %s354 = scalar_lea.vmem %s1, %s353
        $region40: #{tpu_custom_call.1} parent=31 // pred_fallthru
          _
        // Predicated region
        $region41: #{tpu_custom_call.1} parent=31 // pred_check
          %p355 = pneg %p109
        $region42: #{tpu_custom_call.1} parent=31 // pred_check_branch
          %357 = sbr.rel (%p355) target = $region44
        $region43: #{tpu_custom_call.1} parent=31 // pred_region
          %p358 = scmp.lt.s32.totalorder %s31, 3
          %s359 = scalar_select %p358, %s31, 3
          %s360 = scalar_lea.vmem %s2, %s359
        $region44: #{tpu_custom_call.1} parent=31 // pred_fallthru
          _
        // Predicated region
        $region45: #{tpu_custom_call.1} parent=31 // pred_check
          %p361 = pneg %p156
        $region46: #{tpu_custom_call.1} parent=31 // pred_check_branch
          %363 = sbr.rel (%p361) target = $region48
        $region47: #{tpu_custom_call.1} parent=31 // pred_region
          %s364 = sand.u32 %s146, 1
          %s365 = scalar_lea.sflag [#allocation4], %s364
          %s366 = sand.u32 %s146, 1
          %s367 = smul.addr %s366, 160
          %s368 = scalar_lea.vmem [#allocation3], %s367
          %s370 = ssub.s32 2560, 2560
          %371 = vsyncadd %s365, %s370
          %s372 = smul.addr %s31, 20
          %s373 = smul.addr %s372, 128
          %s374 = scalar_lea.hbm %s4, %s373
          %s375 = sshll.u32 %s368, 4
          %s376 = int_to_ptr.vmem [resolvable:$true] %s375
          %381 = dma.hbm_to_vmem [thread:$0]  %s374, 2560, %s376, %s365, 128, 128, 8
        $region48: #{tpu_custom_call.1} parent=31 // pred_fallthru
          _
        // Predicated region
        $region49: #{tpu_custom_call.1} parent=31 // pred_check
          %p382 = pneg %p182
        $region50: #{tpu_custom_call.1} parent=31 // pred_check_branch
          %384 = sbr.rel (%p382) target = $region52
        $region51: #{tpu_custom_call.1} parent=31 // pred_region
          %p385 = scmp.lt.s32.totalorder %s31, 3
          %s386 = scalar_select %p385, %s31, 3
          %s387 = scalar_lea.vmem %s5, %s386
        $region52: #{tpu_custom_call.1} parent=31 // pred_fallthru
          _
        // Predicated region
        $region53: #{tpu_custom_call.1} parent=31 // pred_check
          %p388 = pneg %p208
        $region54: #{tpu_custom_call.1} parent=31 // pred_check_branch
          %390 = sbr.rel (%p388) target = $region56
        $region55: #{tpu_custom_call.1} parent=31 // pred_region
          %s391 = sand.u32 %s198, 1
          %s392 = scalar_lea.sflag [#allocation7], %s391
          %s393 = sand.u32 %s198, 1
          %s394 = smul.addr %s393, 160
          %s395 = scalar_lea.vmem [#allocation6], %s394
          %s397 = ssub.s32 2560, 2560
          %398 = vsyncadd %s392, %s397
          %s399 = smul.addr %s31, 40
          %s400 = smul.addr %s399, 64
          %s401 = scalar_lea.hbm %s6, %s400
          %s402 = sshll.u32 %s395, 4
          %s403 = int_to_ptr.vmem [resolvable:$true] %s402
          %408 = dma.hbm_to_vmem [thread:$0]  %s401, 2560, %s403, %s392, 64, 64, 4
        $region56: #{tpu_custom_call.1} parent=31 // pred_fallthru
          _
      $region32: #{tpu_custom_call.1} parent=5 // pred_fallthru
        _
      %p409 = scmp.le.s32.totalorder 1, %s23
      %p410 = scmp.lt.s32.totalorder %s23, 5
      %p411 = pnand %p409, %p410
      %p412 = pneg %p411
      // Predicated region
      $region57: #{tpu_custom_call.1} parent=5 // pred_check
        _
      $region58: #{tpu_custom_call.1} parent=5 // pred_check_branch
        %414 = sbr.rel (%p411) target = $region60
      $region59: #{tpu_custom_call.1} parent=5 // pred_region
        %s415 = ssub.s32 %s23, 1
        %s416 = sand.u32 %s149, 1
        %s417 = scalar_lea.sflag [#allocation4], %s416
        %s418 = sand.u32 %s149, 1
        %s419 = smul.addr %s418, 160
        %s420 = scalar_lea.vmem [#allocation3], %s419
        // Predicated region
        $region61: #{tpu_custom_call.1} parent=59 // pred_check
          %p421 = pneg %p162
        $region62: #{tpu_custom_call.1} parent=59 // pred_check_branch
          %423 = sbr.rel (%p421) target = $region64
        $region63: #{tpu_custom_call.1} parent=59 // pred_region
          %424 = dma.done %s417, 2560
        $region64: #{tpu_custom_call.1} parent=59 // pred_fallthru
          _
        %s425 = sand.u32 %s201, 1
        %s426 = scalar_lea.sflag [#allocation7], %s425
        %s427 = sand.u32 %s201, 1
        %s428 = smul.addr %s427, 160
        %s429 = scalar_lea.vmem [#allocation6], %s428
        // Predicated region
        $region65: #{tpu_custom_call.1} parent=59 // pred_check
          %p430 = pneg %p214
        $region66: #{tpu_custom_call.1} parent=59 // pred_check_branch
          %432 = sbr.rel (%p430) target = $region68
        $region67: #{tpu_custom_call.1} parent=59 // pred_region
          %433 = dma.done %s426, 2560
        $region68: #{tpu_custom_call.1} parent=59 // pred_fallthru
          _
        %s434 = smul.u32 2, %s32
        %p435 = scmp.lt.s32.totalorder %s33, 3
        %s436 = scalar_select %p435, %s33, 3
        %p437 = scmp.lt.s32.totalorder %s434, 1
        %s438 = scalar_select %p437, %s434, 1
        %s439 = smul.addr %s438, 3
        %s440 = smul.addr %s436, 6
        %s441 = sadd.s32 %s439, %s440
        %s442 = smul.addr %s441, 8
        %s443 = scalar_lea.vmem %s0, %s442
        %p444 = pneg %p63
        %p445 = pneg %p60
        %p446 = scmp.lt.s32.totalorder %s33, 3
        %s447 = scalar_select %p446, %s33, 3
        %s448 = smul.addr %s447, 8
        %s449 = scalar_lea.vmem %s1, %s448
        %p450 = pneg %p89
        %p451 = pneg %p86
        %p452 = scmp.lt.s32.totalorder %s33, 3
        %s453 = scalar_select %p452, %s33, 3
        %s454 = scalar_lea.vmem %s2, %s453
        %p455 = pneg %p115
        %p456 = pneg %p112
        %p457 = pneg %p136
        %p458 = pneg %p133
        %s459 = sand.u32 %s149, 1
        %s460 = scalar_lea.sflag [#allocation4], %s459
        %s461 = sand.u32 %s149, 1
        %s462 = smul.addr %s461, 160
        %s463 = scalar_lea.vmem [#allocation3], %s462
        %p464 = pneg %p162
        %p465 = pneg %p159
        %p466 = scmp.lt.s32.totalorder %s33, 3
        %s467 = scalar_select %p466, %s33, 3
        %s468 = scalar_lea.vmem %s5, %s467
        %p469 = pneg %p188
        %p470 = pneg %p185
        %s471 = sand.u32 %s201, 1
        %s472 = scalar_lea.sflag [#allocation7], %s471
        %s473 = sand.u32 %s201, 1
        %s474 = smul.addr %s473, 160
        %s475 = scalar_lea.vmem [#allocation6], %s474
        %p476 = pneg %p214
        %p477 = pneg %p211
        %p478 = pneg %p235
        %p479 = pneg %p232
        %p480 = pneg %p256
        %p481 = pneg %p253
        %p482 = pneg %p277
        %p483 = pneg %p274
        %p484 = pneg %p303
        %p485 = pneg %p300
        %s486 = smul.u32 2, %s32
        %p487 = scmp.lt.s32.totalorder %s33, 3
        %s488 = scalar_select %p487, %s33, 3
        %p489 = scmp.lt.s32.totalorder %s486, 1
        %s490 = scalar_select %p489, %s486, 1
        %s491 = smul.addr %s490, 3
        %s492 = smul.addr %s488, 6
        %s493 = sadd.s32 %s491, %s492
        %s494 = smul.addr %s493, 8
        %s495 = scalar_lea.vmem %s0, %s494
        %s496 = smul.u32 2, %s32
        %p497 = scmp.lt.s32.totalorder %s33, 3
        %s498 = scalar_select %p497, %s33, 3
        %s499 = smul.addr %s498, 8
        %s500 = scalar_lea.vmem %s1, %s499
        %p501 = scmp.lt.s32.totalorder %s33, 3
        %s502 = scalar_select %p501, %s33, 3
        %s503 = scalar_lea.vmem %s2, %s502
        %p504 = scmp.lt.s32.totalorder %s33, 3
        %s505 = scalar_select %p504, %s33, 3
        %s506 = scalar_lea.vmem %s5, %s505
        %p508 = scmp.eq.s32.totalorder %s33, 0
        // Predicated region
        $region69: #{tpu_custom_call.1} parent=59 // pred_check
          %p509 = pneg %p508
        $region70: #{tpu_custom_call.1} parent=59 // pred_check_branch
          %511 = sbr.rel (%p509) target = $region72
        $region71: #{tpu_custom_call.1} parent=59 // pred_region
          %512 = vst [vmem:[#allocation2] sm:$0x3] 0.0
        $region72: #{tpu_custom_call.1} parent=59 // pred_fallthru
          _
        %v513 = vld [vmem:[%s495] sm:$0xff]
        %v514 = vld [vmem:[%s495 + $0x8] sm:$0xff]
        %v515 = vld [vmem:[%s495 + $0x10] sm:$0xff]
        %v516 = vld [vmem:[%s495 + $0x18] sm:$0xff]
        %v517 = vld [vmem:[%s495 + $0x20] sm:$0xff]
        %v518 = vld [vmem:[%s495 + $0x28] sm:$0xff]
        %v519 = vld [vmem:[%s500] sm:$0x1f]
        %521 = vset.pattern.permute.xlu0 0
        %522 = vperm.xlu0 %521, %v513
        %v523 = vpop.permute.xlu0 %522
        %526 = vset.pattern.permute.xlu0 0
        %527 = vperm.xlu0 %526, %v514
        %v528 = vpop.permute.xlu0 %527
        %531 = vset.pattern.permute.xlu0 0
        %532 = vperm.xlu0 %531, %v516
        %v533 = vpop.permute.xlu0 %532
        %536 = vset.pattern.permute.xlu0 0
        %537 = vperm.xlu0 %536, %v517
        %v538 = vpop.permute.xlu0 %537
        %v540 = vlaneseq
        %v541 = vshrl.u32 %v540, 7
        %v542 = vsub.s32 0, %v541
        %v543 = vrot.slane %v519, %v542
        %v544 = vmul.f32 %v523, %v543
        %v545 = vmul.f32 %v528, %v543
        %v546 = vmul.f32 %v533, %v543
        %v547 = vmul.f32 %v538, %v543
        %549 = vset.pattern.permute.xlu0 0
        %550 = vperm.xlu0 %549, %v515
        %v551 = vpop.permute.xlu0 %550
        %554 = vset.pattern.permute.xlu0 0
        %555 = vperm.xlu0 %554, %v518
        %v556 = vpop.permute.xlu0 %555
        %v558 = vlaneseq
        %v559 = vshrl.u32 %v558, 7
        %v560 = vsub.s32 1, %v559
        %v561 = vrot.slane %v519, %v560
        %v562 = vmul.f32 %v523, %v561
        %v563 = vmul.f32 %v528, %v561
        %v564 = vmul.f32 %v551, %v561
        %v565 = vmul.f32 %v533, %v561
        %v566 = vmul.f32 %v538, %v561
        %v567 = vmul.f32 %v556, %v561
        %vm574 = vcmask 1046528
        %v575 = vrot.slane %v562, 1
        %v576 = vrot.slane %v563, 1
        %v577 = vsel %vm574, %v575, %v576
        %v578 = vrot.slane %v564, 1
        %v579 = vsel %vm574, %v576, %v578
        %v580 = vrot.slane %v565, 1
        %v581 = vrot.slane %v566, 1
        %v582 = vsel %vm574, %v580, %v581
        %v583 = vrot.slane %v567, 1
        %v584 = vsel %vm574, %v581, %v583
        %v589 = vadd.f32 %v544, %v577
        %v590 = vadd.f32 %v545, %v579
        %v591 = vadd.f32 %v546, %v582
        %v592 = vadd.f32 %v547, %v584
        %v593 = vlaneseq
        %v594 = vshrl.u32 %v593, 7
        %v595 = vsub.s32 2, %v594
        %v596 = vrot.slane %v519, %v595
        %v597 = vmul.f32 %v523, %v596
        %v598 = vmul.f32 %v528, %v596
        %v599 = vmul.f32 %v551, %v596
        %v600 = vmul.f32 %v533, %v596
        %v601 = vmul.f32 %v538, %v596
        %v602 = vmul.f32 %v556, %v596
        %vm609 = vcmask 1045504
        %v610 = vrot.slane %v597, 2
        %v611 = vrot.slane %v598, 2
        %v612 = vsel %vm609, %v610, %v611
        %v613 = vrot.slane %v599, 2
        %v614 = vsel %vm609, %v611, %v613
        %v615 = vrot.slane %v600, 2
        %v616 = vrot.slane %v601, 2
        %v617 = vsel %vm609, %v615, %v616
        %v618 = vrot.slane %v602, 2
        %v619 = vsel %vm609, %v616, %v618
        %v624 = vadd.f32 %v589, %v612
        %v625 = vadd.f32 %v590, %v614
        %v626 = vadd.f32 %v591, %v617
        %v627 = vadd.f32 %v592, %v619
        %v628 = vlaneseq
        %v629 = vshrl.u32 %v628, 7
        %v630 = vsub.s32 3, %v629
        %v631 = vrot.slane %v519, %v630
        %v632 = vmul.f32 %v523, %v631
        %v633 = vmul.f32 %v528, %v631
        %v634 = vmul.f32 %v551, %v631
        %v635 = vmul.f32 %v533, %v631
        %v636 = vmul.f32 %v538, %v631
        %v637 = vmul.f32 %v556, %v631
        %vm644 = vcmask 1044480
        %v645 = vrot.slane %v632, 3
        %v646 = vrot.slane %v633, 3
        %v647 = vsel %vm644, %v645, %v646
        %v648 = vrot.slane %v634, 3
        %v649 = vsel %vm644, %v646, %v648
        %v650 = vrot.slane %v635, 3
        %v651 = vrot.slane %v636, 3
        %v652 = vsel %vm644, %v650, %v651
        %v653 = vrot.slane %v637, 3
        %v654 = vsel %vm644, %v651, %v653
        %v659 = vadd.f32 %v624, %v647
        %v660 = vadd.f32 %v625, %v649
        %v661 = vadd.f32 %v626, %v652
        %v662 = vadd.f32 %v627, %v654
        %v663 = vlaneseq
        %v664 = vshrl.u32 %v663, 7
        %v665 = vsub.s32 4, %v664
        %v666 = vrot.slane %v519, %v665
        %v667 = vmul.f32 %v523, %v666
        %v668 = vmul.f32 %v528, %v666
        %v669 = vmul.f32 %v551, %v666
        %v670 = vmul.f32 %v533, %v666
        %v671 = vmul.f32 %v538, %v666
        %v672 = vmul.f32 %v556, %v666
        %vm679 = vcmask 1043456
        %v680 = vrot.slane %v667, 4
        %v681 = vrot.slane %v668, 4
        %v682 = vsel %vm679, %v680, %v681
        %v683 = vrot.slane %v669, 4
        %v684 = vsel %vm679, %v681, %v683
        %v685 = vrot.slane %v670, 4
        %v686 = vrot.slane %v671, 4
        %v687 = vsel %vm679, %v685, %v686
        %v688 = vrot.slane %v672, 4
        %v689 = vsel %vm679, %v686, %v688
        %v694 = vadd.f32 %v659, %v682
        %v695 = vadd.f32 %v660, %v684
        %v696 = vadd.f32 %v661, %v687
        %v697 = vadd.f32 %v662, %v689
        %v698 = vld [vmem:[%s503] sm:$0x1]
        %v700 = vlaneseq
        %v701 = vshrl.u32 %v700, 7
        %v702 = vsub.s32 0, %v701
        %v703 = vrot.slane %v698, %v702
        %v705 = vadd.f32 %v694, %v703
        %v706 = vadd.f32 %v695, %v703
        %v707 = vadd.f32 %v696, %v703
        %v708 = vadd.f32 %v697, %v703
        %v709 = vmax.f32 %v705, 0.0
        %v710 = vmax.f32 %v706, 0.0
        %v711 = vmax.f32 %v707, 0.0
        %v712 = vmax.f32 %v708, 0.0
        %vm718 = vcmask 1040384
        %v719 = vrot.slane %v709, 7
        %v720 = vrot.slane %v710, 7
        %v721 = vsel %vm718, %v719, %v720
        %v722 = vrot.slane 0.0, 7
        %v723 = vsel %vm718, %v720, %v722
        %v724 = vrot.slane %v711, 7
        %v725 = vrot.slane %v712, 7
        %v726 = vsel %vm718, %v724, %v725
        %v727 = vsel %vm718, %v725, %v722
        %v734 = vsel %vm718, 0.0, %v719
        %v735 = vsel %vm718, 0.0, %v724
        %v736 = vmax.f32 %v709, %v734
        %v737 = vmax.f32 %v710, %v721
        %v738 = vmax.f32 %v723, 0.0
        %v739 = vmax.f32 %v711, %v735
        %v740 = vmax.f32 %v712, %v726
        %v741 = vmax.f32 %v727, 0.0
        %v742 = vld [vmem:[%s3] sm:$0xff]
        %v743 = vld [vmem:[%s3 + $0x8] sm:$0xff]
        %v744 = vld [vmem:[%s3 + $0x10] sm:$0xff]
        %v745 = vld [vmem:[%s3 + $0x18] sm:$0xff]
        %vm746 = vcmask 392192
        %v748 = vsel %vm746, %v742, 0
        %v751 = vsel %vm746, %v743, 0
        %v754 = vsel %vm746, %v744, 0
        %v757 = vsel %vm746, %v745, 0
        %759 = vmatprep.subr.mxu0 0.0
        %760 = vmatpush1.msra.mxu0 %v736
        %761 = vmatprep.subr.mxu0 0.0
        %762 = vmatpush1.msra.mxu0 %v737
        %763 = vmatprep.subr.mxu0 0.0
        %764 = vmatpush1.msra.mxu0 %v738
        %765 = vmatprep.subr.mxu0 0.0
        %766 = vmatpush1.msra.mxu0 %v739
        %767 = vmatprep.subr.mxu0 0.0
        %768 = vmatpush1.msra.mxu0 %v740
        %769 = vmatprep.subr.mxu0 0.0
        %770 = vmatpush1.msra.mxu0 %v741
        %771 = vmatprep.subr.mxu0 0.0
        %772 = vmatpush1.msra.mxu0 0.0
        %773 = vmatprep.subr.mxu0 0.0
        %774 = vmatpush1.msra.mxu0 0.0
        %775 = vmatprep.subr.mxu0 0.0
        %776 = vmatpush1.msra.mxu0 0.0
        %777 = vmatprep.subr.mxu0 0.0
        %778 = vmatpush1.msra.mxu0 0.0
        %779 = vmatprep.subr.mxu0 0.0
        %780 = vmatpush1.msra.mxu0 0.0
        %781 = vmatprep.subr.mxu0 0.0
        %782 = vmatpush1.msra.mxu0 0.0
        %783 = vmatprep.subr.mxu0 0.0
        %784 = vmatpush1.msra.mxu0 0.0
        %785 = vmatprep.subr.mxu0 0.0
        %786 = vmatpush1.msra.mxu0 0.0
        %787 = vmatprep.subr.mxu0 0.0
        %788 = vmatpush1.msra.mxu0 0.0
        %789 = vmatprep.subr.mxu0 0.0
        %790 = vmatpush1.msra.mxu0 0.0
        %791 = vmatprep.subr.mxu0 0.0
        %792 = vmatpush1.msra.mxu0 0.0
        %793 = vmatprep.subr.mxu0 0.0
        %794 = vmatpush1.msra.mxu0 0.0
        %795 = vmatprep.subr.mxu0 0.0
        %796 = vmatpush1.msra.mxu0 0.0
        %797 = vmatprep.subr.mxu0 0.0
        %798 = vmatpush1.msra.mxu0 0.0
        %799 = vmatprep.subr.mxu0 0.0
        %800 = vmatpush1.msra.mxu0 0.0
        %801 = vmatprep.subr.mxu0 0.0
        %802 = vmatpush1.msra.mxu0 0.0
        %803 = vmatprep.subr.mxu0 0.0
        %804 = vmatpush1.msra.mxu0 0.0
        %805 = vmatprep.subr.mxu0 0.0
        %806 = vmatpush1.msra.mxu0 0.0
        %807 = vmatprep.subr.mxu0 0.0
        %808 = vmatpush1.msra.mxu0 0.0
        %809 = vmatprep.subr.mxu0 0.0
        %810 = vmatpush1.msra.mxu0 0.0
        %811 = vmatprep.subr.mxu0 0.0
        %812 = vmatpush1.msra.mxu0 0.0
        %813 = vmatprep.subr.mxu0 0.0
        %814 = vmatpush1.msra.mxu0 0.0
        %815 = vmatprep.subr.mxu0 0.0
        %816 = vmatpush1.msra.mxu0 0.0
        %817 = vmatprep.subr.mxu0 0.0
        %818 = vmatpush1.msra.mxu0 0.0
        %819 = vmatprep.subr.mxu0 0.0
        %820 = vmatpush1.msra.mxu0 0.0
        %821 = vmatprep.subr.mxu0 0.0
        %822 = vmatpush1.msra.mxu0 0.0
        %823 = vmatprep.mubr.f32.mxu0 0.0
        %824 = vmatmul.mubr.f32.gmra.mrb[0].mxu0 %v748
        %v825 = vpop.f32.mrb[0].mxu0
        %v826 = vadd.f32 0.0, %v825
        %v827 = vpop.f32.mrb[0].mxu0
        %828 = vmatprep.mubr.f32.mxu0 0.0
        %829 = vmatmul.mubr.f32.gmra.mrb[0].mxu0 %v751
        %v830 = vpop.f32.mrb[0].mxu0
        %v831 = vadd.f32 0.0, %v830
        %v832 = vpop.f32.mrb[0].mxu0
        %833 = vmatprep.mubr.f32.mxu0 0.0
        %834 = vmatmul.mubr.f32.gmra.mrb[0].mxu0 %v754
        %v835 = vpop.f32.mrb[0].mxu0
        %v836 = vadd.f32 0.0, %v835
        %v837 = vpop.f32.mrb[0].mxu0
        %838 = vmatprep.mubr.f32.mxu0 0.0
        %839 = vmatmul.mubr.f32.gmra.mrb[0].mxu0 %v757
        %v840 = vpop.f32.mrb[0].mxu0
        %v841 = vadd.f32 0.0, %v840
        %v842 = vpop.f32.mrb[0].mxu0
        %843 = vdwg.mxu0
        %v844 = vld [vmem:[%s420] sm:$0xff]
        %v845 = vld [vmem:[%s420 + $0x8] sm:$0xff]
        %v846 = vld [vmem:[%s420 + $0x10] sm:$0xff]
        %v847 = vld [vmem:[%s420 + $0x18] sm:$0xff]
        %v852 = vrot.slane %v826, 1
        %v853 = vrot.slane %v831, 1
        %v854 = vsel %vm574, %v852, %v853
        %v855 = vrot.slane %v836, 1
        %v856 = vsel %vm574, %v853, %v855
        %v857 = vrot.slane %v841, 1
        %v858 = vsel %vm574, %v855, %v857
        %v860 = vsel %vm574, %v857, 0.0
        %s861 = scalar_lea.vmem %s420, 32 [#allocation3]
        %v862 = vld [vmem:[%s861] sm:$0xff]
        %v863 = vld [vmem:[%s861 + $0x8] sm:$0xff]
        %v864 = vld [vmem:[%s861 + $0x10] sm:$0xff]
        %v865 = vld [vmem:[%s861 + $0x18] sm:$0xff]
        %vm866 = vcmask 261120
        %v867 = vsel %vm866, %v854, 0
        %v869 = vsel %vm866, %v856, 0
        %v871 = vsel %vm866, %v858, 0
        %v874 = vsel %vm866, %v860, 0
        %876 = vmatprep.subr.mxu0 0.0
        %877 = vmatpush1.msra.mxu0 %v862
        %878 = vmatprep.subr.mxu0 0.0
        %879 = vmatpush1.msra.mxu0 %v863
        %880 = vmatprep.subr.mxu0 0.0
        %881 = vmatpush1.msra.mxu0 %v864
        %882 = vmatprep.subr.mxu0 0.0
        %883 = vmatpush1.msra.mxu0 %v865
        %884 = vmatprep.subr.mxu0 0.0
        %885 = vmatpush1.msra.mxu0 0.0
        %886 = vmatprep.subr.mxu0 0.0
        %887 = vmatpush1.msra.mxu0 0.0
        %888 = vmatprep.subr.mxu0 0.0
        %889 = vmatpush1.msra.mxu0 0.0
        %890 = vmatprep.subr.mxu0 0.0
        %891 = vmatpush1.msra.mxu0 0.0
        %892 = vmatprep.subr.mxu0 0.0
        %893 = vmatpush1.msra.mxu0 0.0
        %894 = vmatprep.subr.mxu0 0.0
        %895 = vmatpush1.msra.mxu0 0.0
        %896 = vmatprep.subr.mxu0 0.0
        %897 = vmatpush1.msra.mxu0 0.0
        %898 = vmatprep.subr.mxu0 0.0
        %899 = vmatpush1.msra.mxu0 0.0
        %900 = vmatprep.subr.mxu0 0.0
        %901 = vmatpush1.msra.mxu0 0.0
        %902 = vmatprep.subr.mxu0 0.0
        %903 = vmatpush1.msra.mxu0 0.0
        %904 = vmatprep.subr.mxu0 0.0
        %905 = vmatpush1.msra.mxu0 0.0
        %906 = vmatprep.subr.mxu0 0.0
        %907 = vmatpush1.msra.mxu0 0.0
        %908 = vmatprep.subr.mxu0 0.0
        %909 = vmatpush1.msra.mxu0 0.0
        %910 = vmatprep.subr.mxu0 0.0
        %911 = vmatpush1.msra.mxu0 0.0
        %912 = vmatprep.subr.mxu0 0.0
        %913 = vmatpush1.msra.mxu0 0.0
        %914 = vmatprep.subr.mxu0 0.0
        %915 = vmatpush1.msra.mxu0 0.0
        %916 = vmatprep.subr.mxu0 0.0
        %917 = vmatpush1.msra.mxu0 0.0
        %918 = vmatprep.subr.mxu0 0.0
        %919 = vmatpush1.msra.mxu0 0.0
        %920 = vmatprep.subr.mxu0 0.0
        %921 = vmatpush1.msra.mxu0 0.0
        %922 = vmatprep.subr.mxu0 0.0
        %923 = vmatpush1.msra.mxu0 0.0
        %924 = vmatprep.subr.mxu0 0.0
        %925 = vmatpush1.msra.mxu0 0.0
        %926 = vmatprep.subr.mxu0 0.0
        %927 = vmatpush1.msra.mxu0 0.0
        %928 = vmatprep.subr.mxu0 0.0
        %929 = vmatpush1.msra.mxu0 0.0
        %930 = vmatprep.subr.mxu0 0.0
        %931 = vmatpush1.msra.mxu0 0.0
        %932 = vmatprep.subr.mxu0 0.0
        %933 = vmatpush1.msra.mxu0 0.0
        %934 = vmatprep.subr.mxu0 0.0
        %935 = vmatpush1.msra.mxu0 0.0
        %936 = vmatprep.subr.mxu0 0.0
        %937 = vmatpush1.msra.mxu0 0.0
        %938 = vmatprep.subr.mxu0 0.0
        %939 = vmatpush1.msra.mxu0 0.0
        %940 = vmatprep.mubr.f32.mxu0 0.0
        %941 = vmatmul.mubr.f32.gmra.mrb[0].mxu0 %v867
        %v942 = vpop.f32.mrb[0].mxu0
        %v943 = vadd.f32 0.0, %v942
        %v944 = vpop.f32.mrb[0].mxu0
        %945 = vmatprep.mubr.f32.mxu0 0.0
        %946 = vmatmul.mubr.f32.gmra.mrb[0].mxu0 %v869
        %v947 = vpop.f32.mrb[0].mxu0
        %v948 = vadd.f32 0.0, %v947
        %v949 = vpop.f32.mrb[0].mxu0
        %950 = vmatprep.mubr.f32.mxu0 0.0
        %951 = vmatmul.mubr.f32.gmra.mrb[0].mxu0 %v871
        %v952 = vpop.f32.mrb[0].mxu0
        %v953 = vadd.f32 0.0, %v952
        %v954 = vpop.f32.mrb[0].mxu0
        %955 = vmatprep.mubr.f32.mxu0 0.0
        %956 = vmatmul.mubr.f32.gmra.mrb[0].mxu0 %v874
        %v957 = vpop.f32.mrb[0].mxu0
        %v958 = vadd.f32 0.0, %v957
        %v959 = vpop.f32.mrb[0].mxu0
        %960 = vdwg.mxu0
        %v961 = vsel %vm866, %v826, 0
        %v963 = vsel %vm866, %v831, 0
        %v965 = vsel %vm866, %v836, 0
        %v967 = vsel %vm866, %v841, 0
        %969 = vmatprep.subr.mxu0 0.0
        %970 = vmatpush1.msra.mxu0 %v844
        %971 = vmatprep.subr.mxu0 0.0
        %972 = vmatpush1.msra.mxu0 %v845
        %973 = vmatprep.subr.mxu0 0.0
        %974 = vmatpush1.msra.mxu0 %v846
        %975 = vmatprep.subr.mxu0 0.0
        %976 = vmatpush1.msra.mxu0 %v847
        %977 = vmatprep.subr.mxu0 0.0
        %978 = vmatpush1.msra.mxu0 0.0
        %979 = vmatprep.subr.mxu0 0.0
        %980 = vmatpush1.msra.mxu0 0.0
        %981 = vmatprep.subr.mxu0 0.0
        %982 = vmatpush1.msra.mxu0 0.0
        %983 = vmatprep.subr.mxu0 0.0
        %984 = vmatpush1.msra.mxu0 0.0
        %985 = vmatprep.subr.mxu0 0.0
        %986 = vmatpush1.msra.mxu0 0.0
        %987 = vmatprep.subr.mxu0 0.0
        %988 = vmatpush1.msra.mxu0 0.0
        %989 = vmatprep.subr.mxu0 0.0
        %990 = vmatpush1.msra.mxu0 0.0
        %991 = vmatprep.subr.mxu0 0.0
        %992 = vmatpush1.msra.mxu0 0.0
        %993 = vmatprep.subr.mxu0 0.0
        %994 = vmatpush1.msra.mxu0 0.0
        %995 = vmatprep.subr.mxu0 0.0
        %996 = vmatpush1.msra.mxu0 0.0
        %997 = vmatprep.subr.mxu0 0.0
        %998 = vmatpush1.msra.mxu0 0.0
        %999 = vmatprep.subr.mxu0 0.0
        %1000 = vmatpush1.msra.mxu0 0.0
        %1001 = vmatprep.subr.mxu0 0.0
        %1002 = vmatpush1.msra.mxu0 0.0
        %1003 = vmatprep.subr.mxu0 0.0
        %1004 = vmatpush1.msra.mxu0 0.0
        %1005 = vmatprep.subr.mxu0 0.0
        %1006 = vmatpush1.msra.mxu0 0.0
        %1007 = vmatprep.subr.mxu0 0.0
        %1008 = vmatpush1.msra.mxu0 0.0
        %1009 = vmatprep.subr.mxu0 0.0
        %1010 = vmatpush1.msra.mxu0 0.0
        %1011 = vmatprep.subr.mxu0 0.0
        %1012 = vmatpush1.msra.mxu0 0.0
        %1013 = vmatprep.subr.mxu0 0.0
        %1014 = vmatpush1.msra.mxu0 0.0
        %1015 = vmatprep.subr.mxu0 0.0
        %1016 = vmatpush1.msra.mxu0 0.0
        %1017 = vmatprep.subr.mxu0 0.0
        %1018 = vmatpush1.msra.mxu0 0.0
        %1019 = vmatprep.subr.mxu0 0.0
        %1020 = vmatpush1.msra.mxu0 0.0
        %1021 = vmatprep.subr.mxu0 0.0
        %1022 = vmatpush1.msra.mxu0 0.0
        %1023 = vmatprep.subr.mxu0 0.0
        %1024 = vmatpush1.msra.mxu0 0.0
        %1025 = vmatprep.subr.mxu0 0.0
        %1026 = vmatpush1.msra.mxu0 0.0
        %1027 = vmatprep.subr.mxu0 0.0
        %1028 = vmatpush1.msra.mxu0 0.0
        %1029 = vmatprep.subr.mxu0 0.0
        %1030 = vmatpush1.msra.mxu0 0.0
        %1031 = vmatprep.subr.mxu0 0.0
        %1032 = vmatpush1.msra.mxu0 0.0
        %1033 = vmatprep.mubr.f32.mxu0 0.0
        %1034 = vmatmul.mubr.f32.gmra.mrb[0].mxu0 %v961
        %v1035 = vpop.f32.mrb[0].mxu0
        %v1036 = vadd.f32 %v943, %v1035
        %v1037 = vpop.f32.mrb[0].mxu0
        %1038 = vmatprep.mubr.f32.mxu0 0.0
        %1039 = vmatmul.mubr.f32.gmra.mrb[0].mxu0 %v963
        %v1040 = vpop.f32.mrb[0].mxu0
        %v1041 = vadd.f32 %v948, %v1040
        %v1042 = vpop.f32.mrb[0].mxu0
        %1043 = vmatprep.mubr.f32.mxu0 0.0
        %1044 = vmatmul.mubr.f32.gmra.mrb[0].mxu0 %v965
        %v1045 = vpop.f32.mrb[0].mxu0
        %v1046 = vadd.f32 %v953, %v1045
        %v1047 = vpop.f32.mrb[0].mxu0
        %1048 = vmatprep.mubr.f32.mxu0 0.0
        %1049 = vmatmul.mubr.f32.gmra.mrb[0].mxu0 %v967
        %v1050 = vpop.f32.mrb[0].mxu0
        %v1051 = vadd.f32 %v958, %v1050
        %v1052 = vpop.f32.mrb[0].mxu0
        %1053 = vdwg.mxu0
        %v1054 = vrot.slane %v826, 2
        %v1055 = vrot.slane %v831, 2
        %v1056 = vsel %vm609, %v1054, %v1055
        %v1057 = vrot.slane %v836, 2
        %v1058 = vsel %vm609, %v1055, %v1057
        %v1059 = vrot.slane %v841, 2
        %v1060 = vsel %vm609, %v1057, %v1059
        %v1062 = vsel %vm609, %v1059, 0.0
        %s1063 = scalar_lea.vmem %s420, 64 [#allocation3]
        %v1064 = vld [vmem:[%s1063] sm:$0xff]
        %v1065 = vld [vmem:[%s1063 + $0x8] sm:$0xff]
        %v1066 = vld [vmem:[%s1063 + $0x10] sm:$0xff]
        %v1067 = vld [vmem:[%s1063 + $0x18] sm:$0xff]
        %v1068 = vsel %vm866, %v1056, 0
        %v1070 = vsel %vm866, %v1058, 0
        %v1072 = vsel %vm866, %v1060, 0
        %v1075 = vsel %vm866, %v1062, 0
        %1077 = vmatprep.subr.mxu0 0.0
        %1078 = vmatpush1.msra.mxu0 %v1064
        %1079 = vmatprep.subr.mxu0 0.0
        %1080 = vmatpush1.msra.mxu0 %v1065
        %1081 = vmatprep.subr.mxu0 0.0
        %1082 = vmatpush1.msra.mxu0 %v1066
        %1083 = vmatprep.subr.mxu0 0.0
        %1084 = vmatpush1.msra.mxu0 %v1067
        %1085 = vmatprep.subr.mxu0 0.0
        %1086 = vmatpush1.msra.mxu0 0.0
        %1087 = vmatprep.subr.mxu0 0.0
        %1088 = vmatpush1.msra.mxu0 0.0
        %1089 = vmatprep.subr.mxu0 0.0
        %1090 = vmatpush1.msra.mxu0 0.0
        %1091 = vmatprep.subr.mxu0 0.0
        %1092 = vmatpush1.msra.mxu0 0.0
        %1093 = vmatprep.subr.mxu0 0.0
        %1094 = vmatpush1.msra.mxu0 0.0
        %1095 = vmatprep.subr.mxu0 0.0
        %1096 = vmatpush1.msra.mxu0 0.0
        %1097 = vmatprep.subr.mxu0 0.0
        %1098 = vmatpush1.msra.mxu0 0.0
        %1099 = vmatprep.subr.mxu0 0.0
        %1100 = vmatpush1.msra.mxu0 0.0
        %1101 = vmatprep.subr.mxu0 0.0
        %1102 = vmatpush1.msra.mxu0 0.0
        %1103 = vmatprep.subr.mxu0 0.0
        %1104 = vmatpush1.msra.mxu0 0.0
        %1105 = vmatprep.subr.mxu0 0.0
        %1106 = vmatpush1.msra.mxu0 0.0
        %1107 = vmatprep.subr.mxu0 0.0
        %1108 = vmatpush1.msra.mxu0 0.0
        %1109 = vmatprep.subr.mxu0 0.0
        %1110 = vmatpush1.msra.mxu0 0.0
        %1111 = vmatprep.subr.mxu0 0.0
        %1112 = vmatpush1.msra.mxu0 0.0
        %1113 = vmatprep.subr.mxu0 0.0
        %1114 = vmatpush1.msra.mxu0 0.0
        %1115 = vmatprep.subr.mxu0 0.0
        %1116 = vmatpush1.msra.mxu0 0.0
        %1117 = vmatprep.subr.mxu0 0.0
        %1118 = vmatpush1.msra.mxu0 0.0
        %1119 = vmatprep.subr.mxu0 0.0
        %1120 = vmatpush1.msra.mxu0 0.0
        %1121 = vmatprep.subr.mxu0 0.0
        %1122 = vmatpush1.msra.mxu0 0.0
        %1123 = vmatprep.subr.mxu0 0.0
        %1124 = vmatpush1.msra.mxu0 0.0
        %1125 = vmatprep.subr.mxu0 0.0
        %1126 = vmatpush1.msra.mxu0 0.0
        %1127 = vmatprep.subr.mxu0 0.0
        %1128 = vmatpush1.msra.mxu0 0.0
        %1129 = vmatprep.subr.mxu0 0.0
        %1130 = vmatpush1.msra.mxu0 0.0
        %1131 = vmatprep.subr.mxu0 0.0
        %1132 = vmatpush1.msra.mxu0 0.0
        %1133 = vmatprep.subr.mxu0 0.0
        %1134 = vmatpush1.msra.mxu0 0.0
        %1135 = vmatprep.subr.mxu0 0.0
        %1136 = vmatpush1.msra.mxu0 0.0
        %1137 = vmatprep.subr.mxu0 0.0
        %1138 = vmatpush1.msra.mxu0 0.0
        %1139 = vmatprep.subr.mxu0 0.0
        %1140 = vmatpush1.msra.mxu0 0.0
        %1141 = vmatprep.mubr.f32.mxu0 0.0
        %1142 = vmatmul.mubr.f32.gmra.mrb[0].mxu0 %v1068
        %v1143 = vpop.f32.mrb[0].mxu0
        %v1144 = vadd.f32 0.0, %v1143
        %v1145 = vpop.f32.mrb[0].mxu0
        %1146 = vmatprep.mubr.f32.mxu0 0.0
        %1147 = vmatmul.mubr.f32.gmra.mrb[0].mxu0 %v1070
        %v1148 = vpop.f32.mrb[0].mxu0
        %v1149 = vadd.f32 0.0, %v1148
        %v1150 = vpop.f32.mrb[0].mxu0
        %1151 = vmatprep.mubr.f32.mxu0 0.0
        %1152 = vmatmul.mubr.f32.gmra.mrb[0].mxu0 %v1072
        %v1153 = vpop.f32.mrb[0].mxu0
        %v1154 = vadd.f32 0.0, %v1153
        %v1155 = vpop.f32.mrb[0].mxu0
        %1156 = vmatprep.mubr.f32.mxu0 0.0
        %1157 = vmatmul.mubr.f32.gmra.mrb[0].mxu0 %v1075
        %v1158 = vpop.f32.mrb[0].mxu0
        %v1159 = vadd.f32 0.0, %v1158
        %v1160 = vpop.f32.mrb[0].mxu0
        %1161 = vdwg.mxu0
        %v1162 = vadd.f32 %v1036, %v1144
        %v1163 = vadd.f32 %v1041, %v1149
        %v1164 = vadd.f32 %v1046, %v1154
        %v1165 = vadd.f32 %v1051, %v1159
        %v1166 = vrot.slane %v826, 3
        %v1167 = vrot.slane %v831, 3
        %v1168 = vsel %vm644, %v1166, %v1167
        %v1169 = vrot.slane %v836, 3
        %v1170 = vsel %vm644, %v1167, %v1169
        %v1171 = vrot.slane %v841, 3
        %v1172 = vsel %vm644, %v1169, %v1171
        %v1174 = vsel %vm644, %v1171, 0.0
        %s1175 = scalar_lea.vmem %s420, 96 [#allocation3]
        %v1176 = vld [vmem:[%s1175] sm:$0xff]
        %v1177 = vld [vmem:[%s1175 + $0x8] sm:$0xff]
        %v1178 = vld [vmem:[%s1175 + $0x10] sm:$0xff]
        %v1179 = vld [vmem:[%s1175 + $0x18] sm:$0xff]
        %v1180 = vsel %vm866, %v1168, 0
        %v1182 = vsel %vm866, %v1170, 0
        %v1184 = vsel %vm866, %v1172, 0
        %v1187 = vsel %vm866, %v1174, 0
        %1189 = vmatprep.subr.mxu0 0.0
        %1190 = vmatpush1.msra.mxu0 %v1176
        %1191 = vmatprep.subr.mxu0 0.0
        %1192 = vmatpush1.msra.mxu0 %v1177
        %1193 = vmatprep.subr.mxu0 0.0
        %1194 = vmatpush1.msra.mxu0 %v1178
        %1195 = vmatprep.subr.mxu0 0.0
        %1196 = vmatpush1.msra.mxu0 %v1179
        %1197 = vmatprep.subr.mxu0 0.0
        %1198 = vmatpush1.msra.mxu0 0.0
        %1199 = vmatprep.subr.mxu0 0.0
        %1200 = vmatpush1.msra.mxu0 0.0
        %1201 = vmatprep.subr.mxu0 0.0
        %1202 = vmatpush1.msra.mxu0 0.0
        %1203 = vmatprep.subr.mxu0 0.0
        %1204 = vmatpush1.msra.mxu0 0.0
        %1205 = vmatprep.subr.mxu0 0.0
        %1206 = vmatpush1.msra.mxu0 0.0
        %1207 = vmatprep.subr.mxu0 0.0
        %1208 = vmatpush1.msra.mxu0 0.0
        %1209 = vmatprep.subr.mxu0 0.0
        %1210 = vmatpush1.msra.mxu0 0.0
        %1211 = vmatprep.subr.mxu0 0.0
        %1212 = vmatpush1.msra.mxu0 0.0
        %1213 = vmatprep.subr.mxu0 0.0
        %1214 = vmatpush1.msra.mxu0 0.0
        %1215 = vmatprep.subr.mxu0 0.0
        %1216 = vmatpush1.msra.mxu0 0.0
        %1217 = vmatprep.subr.mxu0 0.0
        %1218 = vmatpush1.msra.mxu0 0.0
        %1219 = vmatprep.subr.mxu0 0.0
        %1220 = vmatpush1.msra.mxu0 0.0
        %1221 = vmatprep.subr.mxu0 0.0
        %1222 = vmatpush1.msra.mxu0 0.0
        %1223 = vmatprep.subr.mxu0 0.0
        %1224 = vmatpush1.msra.mxu0 0.0
        %1225 = vmatprep.subr.mxu0 0.0
        %1226 = vmatpush1.msra.mxu0 0.0
        %1227 = vmatprep.subr.mxu0 0.0
        %1228 = vmatpush1.msra.mxu0 0.0
        %1229 = vmatprep.subr.mxu0 0.0
        %1230 = vmatpush1.msra.mxu0 0.0
        %1231 = vmatprep.subr.mxu0 0.0
        %1232 = vmatpush1.msra.mxu0 0.0
        %1233 = vmatprep.subr.mxu0 0.0
        %1234 = vmatpush1.msra.mxu0 0.0
        %1235 = vmatprep.subr.mxu0 0.0
        %1236 = vmatpush1.msra.mxu0 0.0
        %1237 = vmatprep.subr.mxu0 0.0
        %1238 = vmatpush1.msra.mxu0 0.0
        %1239 = vmatprep.subr.mxu0 0.0
        %1240 = vmatpush1.msra.mxu0 0.0
        %1241 = vmatprep.subr.mxu0 0.0
        %1242 = vmatpush1.msra.mxu0 0.0
        %1243 = vmatprep.subr.mxu0 0.0
        %1244 = vmatpush1.msra.mxu0 0.0
        %1245 = vmatprep.subr.mxu0 0.0
        %1246 = vmatpush1.msra.mxu0 0.0
        %1247 = vmatprep.subr.mxu0 0.0
        %1248 = vmatpush1.msra.mxu0 0.0
        %1249 = vmatprep.subr.mxu0 0.0
        %1250 = vmatpush1.msra.mxu0 0.0
        %1251 = vmatprep.subr.mxu0 0.0
        %1252 = vmatpush1.msra.mxu0 0.0
        %1253 = vmatprep.mubr.f32.mxu0 0.0
        %1254 = vmatmul.mubr.f32.gmra.mrb[0].mxu0 %v1180
        %v1255 = vpop.f32.mrb[0].mxu0
        %v1256 = vadd.f32 0.0, %v1255
        %v1257 = vpop.f32.mrb[0].mxu0
        %1258 = vmatprep.mubr.f32.mxu0 0.0
        %1259 = vmatmul.mubr.f32.gmra.mrb[0].mxu0 %v1182
        %v1260 = vpop.f32.mrb[0].mxu0
        %v1261 = vadd.f32 0.0, %v1260
        %v1262 = vpop.f32.mrb[0].mxu0
        %1263 = vmatprep.mubr.f32.mxu0 0.0
        %1264 = vmatmul.mubr.f32.gmra.mrb[0].mxu0 %v1184
        %v1265 = vpop.f32.mrb[0].mxu0
        %v1266 = vadd.f32 0.0, %v1265
        %v1267 = vpop.f32.mrb[0].mxu0
        %1268 = vmatprep.mubr.f32.mxu0 0.0
        %1269 = vmatmul.mubr.f32.gmra.mrb[0].mxu0 %v1187
        %v1270 = vpop.f32.mrb[0].mxu0
        %v1271 = vadd.f32 0.0, %v1270
        %v1272 = vpop.f32.mrb[0].mxu0
        %1273 = vdwg.mxu0
        %v1274 = vadd.f32 %v1162, %v1256
        %v1275 = vadd.f32 %v1163, %v1261
        %v1276 = vadd.f32 %v1164, %v1266
        %v1277 = vadd.f32 %v1165, %v1271
        %v1278 = vrot.slane %v826, 4
        %v1279 = vrot.slane %v831, 4
        %v1280 = vsel %vm679, %v1278, %v1279
        %v1281 = vrot.slane %v836, 4
        %v1282 = vsel %vm679, %v1279, %v1281
        %v1283 = vrot.slane %v841, 4
        %v1284 = vsel %vm679, %v1281, %v1283
        %v1286 = vsel %vm679, %v1283, 0.0
        %s1287 = scalar_lea.vmem %s420, 128 [#allocation3]
        %v1288 = vld [vmem:[%s1287] sm:$0xff]
        %v1289 = vld [vmem:[%s1287 + $0x8] sm:$0xff]
        %v1290 = vld [vmem:[%s1287 + $0x10] sm:$0xff]
        %v1291 = vld [vmem:[%s1287 + $0x18] sm:$0xff]
        %v1292 = vsel %vm866, %v1280, 0
        %v1294 = vsel %vm866, %v1282, 0
        %v1296 = vsel %vm866, %v1284, 0
        %v1299 = vsel %vm866, %v1286, 0
        %1301 = vmatprep.subr.mxu0 0.0
        %1302 = vmatpush1.msra.mxu0 %v1288
        %1303 = vmatprep.subr.mxu0 0.0
        %1304 = vmatpush1.msra.mxu0 %v1289
        %1305 = vmatprep.subr.mxu0 0.0
        %1306 = vmatpush1.msra.mxu0 %v1290
        %1307 = vmatprep.subr.mxu0 0.0
        %1308 = vmatpush1.msra.mxu0 %v1291
        %1309 = vmatprep.subr.mxu0 0.0
        %1310 = vmatpush1.msra.mxu0 0.0
        %1311 = vmatprep.subr.mxu0 0.0
        %1312 = vmatpush1.msra.mxu0 0.0
        %1313 = vmatprep.subr.mxu0 0.0
        %1314 = vmatpush1.msra.mxu0 0.0
        %1315 = vmatprep.subr.mxu0 0.0
        %1316 = vmatpush1.msra.mxu0 0.0
        %1317 = vmatprep.subr.mxu0 0.0
        %1318 = vmatpush1.msra.mxu0 0.0
        %1319 = vmatprep.subr.mxu0 0.0
        %1320 = vmatpush1.msra.mxu0 0.0
        %1321 = vmatprep.subr.mxu0 0.0
        %1322 = vmatpush1.msra.mxu0 0.0
        %1323 = vmatprep.subr.mxu0 0.0
        %1324 = vmatpush1.msra.mxu0 0.0
        %1325 = vmatprep.subr.mxu0 0.0
        %1326 = vmatpush1.msra.mxu0 0.0
        %1327 = vmatprep.subr.mxu0 0.0
        %1328 = vmatpush1.msra.mxu0 0.0
        %1329 = vmatprep.subr.mxu0 0.0
        %1330 = vmatpush1.msra.mxu0 0.0
        %1331 = vmatprep.subr.mxu0 0.0
        %1332 = vmatpush1.msra.mxu0 0.0
        %1333 = vmatprep.subr.mxu0 0.0
        %1334 = vmatpush1.msra.mxu0 0.0
        %1335 = vmatprep.subr.mxu0 0.0
        %1336 = vmatpush1.msra.mxu0 0.0
        %1337 = vmatprep.subr.mxu0 0.0
        %1338 = vmatpush1.msra.mxu0 0.0
        %1339 = vmatprep.subr.mxu0 0.0
        %1340 = vmatpush1.msra.mxu0 0.0
        %1341 = vmatprep.subr.mxu0 0.0
        %1342 = vmatpush1.msra.mxu0 0.0
        %1343 = vmatprep.subr.mxu0 0.0
        %1344 = vmatpush1.msra.mxu0 0.0
        %1345 = vmatprep.subr.mxu0 0.0
        %1346 = vmatpush1.msra.mxu0 0.0
        %1347 = vmatprep.subr.mxu0 0.0
        %1348 = vmatpush1.msra.mxu0 0.0
        %1349 = vmatprep.subr.mxu0 0.0
        %1350 = vmatpush1.msra.mxu0 0.0
        %1351 = vmatprep.subr.mxu0 0.0
        %1352 = vmatpush1.msra.mxu0 0.0
        %1353 = vmatprep.subr.mxu0 0.0
        %1354 = vmatpush1.msra.mxu0 0.0
        %1355 = vmatprep.subr.mxu0 0.0
        %1356 = vmatpush1.msra.mxu0 0.0
        %1357 = vmatprep.subr.mxu0 0.0
        %1358 = vmatpush1.msra.mxu0 0.0
        %1359 = vmatprep.subr.mxu0 0.0
        %1360 = vmatpush1.msra.mxu0 0.0
        %1361 = vmatprep.subr.mxu0 0.0
        %1362 = vmatpush1.msra.mxu0 0.0
        %1363 = vmatprep.subr.mxu0 0.0
        %1364 = vmatpush1.msra.mxu0 0.0
        %1365 = vmatprep.mubr.f32.mxu0 0.0
        %1366 = vmatmul.mubr.f32.gmra.mrb[0].mxu0 %v1292
        %v1367 = vpop.f32.mrb[0].mxu0
        %v1368 = vadd.f32 0.0, %v1367
        %v1369 = vpop.f32.mrb[0].mxu0
        %1370 = vmatprep.mubr.f32.mxu0 0.0
        %1371 = vmatmul.mubr.f32.gmra.mrb[0].mxu0 %v1294
        %v1372 = vpop.f32.mrb[0].mxu0
        %v1373 = vadd.f32 0.0, %v1372
        %v1374 = vpop.f32.mrb[0].mxu0
        %1375 = vmatprep.mubr.f32.mxu0 0.0
        %1376 = vmatmul.mubr.f32.gmra.mrb[0].mxu0 %v1296
        %v1377 = vpop.f32.mrb[0].mxu0
        %v1378 = vadd.f32 0.0, %v1377
        %v1379 = vpop.f32.mrb[0].mxu0
        %1380 = vmatprep.mubr.f32.mxu0 0.0
        %1381 = vmatmul.mubr.f32.gmra.mrb[0].mxu0 %v1299
        %v1382 = vpop.f32.mrb[0].mxu0
        %v1383 = vadd.f32 0.0, %v1382
        %v1384 = vpop.f32.mrb[0].mxu0
        %1385 = vdwg.mxu0
        %v1386 = vadd.f32 %v1274, %v1368
        %v1387 = vadd.f32 %v1275, %v1373
        %v1388 = vadd.f32 %v1276, %v1378
        %v1389 = vadd.f32 %v1277, %v1383
        %v1390 = vld [vmem:[%s506] sm:$0x1]
        %v1392 = vlaneseq
        %v1393 = vshrl.u32 %v1392, 7
        %v1394 = vsub.s32 0, %v1393
        %v1395 = vrot.slane %v1390, %v1394
        %v1397 = vadd.f32 %v1386, %v1395
        %v1398 = vadd.f32 %v1387, %v1395
        %v1399 = vadd.f32 %v1388, %v1395
        %v1400 = vadd.f32 %v1389, %v1395
        %v1401 = vmax.f32 %v1397, 0.0
        %v1402 = vmax.f32 %v1398, 0.0
        %v1403 = vmax.f32 %v1399, 0.0
        %v1404 = vmax.f32 %v1400, 0.0
        %v1405 = vpack.c.bf16 %v1401, %v1401
        %v1406 = vpack.c.bf16 %v1403, %v1403
        %v1407 = vld [vmem:[%s429] sm:$0xf]
        %v1408 = vld [vmem:[%s429 + $0x4] sm:$0xf]
        %v1409 = vld [vmem:[%s429 + $0x8] sm:$0xf]
        %v1410 = vld [vmem:[%s429 + $0xc] sm:$0xf]
        %v1411 = vld [vmem:[%s429 + $0x10] sm:$0xf]
        %v1412 = vld [vmem:[%s429 + $0x14] sm:$0xf]
        %v1413 = vld [vmem:[%s429 + $0x18] sm:$0xf]
        %v1414 = vld [vmem:[%s429 + $0x1c] sm:$0xf]
        %v1417 = vrot.slane %v1401, 1
        %v1418 = vrot.slane %v1403, 1
        %v1421 = vmax.f32 %v1401, %v1417
        %v1422 = vmax.f32 %v1403, %v1418
        %v1423 = vpack.c.bf16 %v1421, %v1421
        %v1424 = vpack.c.bf16 %v1422, %v1422
        %s1425 = scalar_lea.vmem %s429, 32 [#allocation6]
        %v1426 = vld [vmem:[%s1425] sm:$0xf]
        %v1427 = vld [vmem:[%s1425 + $0x4] sm:$0xf]
        %v1428 = vld [vmem:[%s1425 + $0x8] sm:$0xf]
        %v1429 = vld [vmem:[%s1425 + $0xc] sm:$0xf]
        %v1430 = vld [vmem:[%s1425 + $0x10] sm:$0xf]
        %v1431 = vld [vmem:[%s1425 + $0x14] sm:$0xf]
        %v1432 = vld [vmem:[%s1425 + $0x18] sm:$0xf]
        %v1433 = vld [vmem:[%s1425 + $0x1c] sm:$0xf]
        %v1436 = vunpack.c.l.b16 %v1423
        %v1437 = vunpack.c.l.b16 %v1424
        %v1438 = vrot.slane %v1436, 1
        %vm1439 = vcmask 1041409
        %v1440 = vsel %vm1439, %v1437, %v1438
        %v1441 = vpack.c.b16 %v1440, %v1440
        %v1450 = vunpack.c.l.b16 %v1426
        %v1451 = vunpack.c.l.b16 %v1427
        %v1452 = vunpack.c.l.b16 %v1428
        %v1453 = vunpack.c.l.b16 %v1429
        %v1454 = vunpack.c.l.b16 %v1430
        %v1455 = vunpack.c.l.b16 %v1431
        %v1456 = vunpack.c.l.b16 %v1432
        %v1457 = vunpack.c.l.b16 %v1433
        %v1458 = vpack.c.b16 %v1451, %v1450
        %v1459 = vpack.c.b16 %v1453, %v1452
        %v1460 = vpack.c.b16 %v1455, %v1454
        %v1461 = vpack.c.b16 %v1457, %v1456
        %vm1466 = vcmask 523264
        %v1468 = vsel %vm1466, %v1441, 0
        %1470 = vmatprep.subr.bf16.mxu0 0
        %1471 = vmatpush1.bf16.msra.mxu0 %v1458
        %1472 = vmatprep.subr.bf16.mxu0 0
        %1473 = vmatpush1.bf16.msra.mxu0 %v1459
        %1474 = vmatprep.subr.bf16.mxu0 0
        %1475 = vmatpush1.bf16.msra.mxu0 %v1460
        %1476 = vmatprep.subr.bf16.mxu0 0
        %1477 = vmatpush1.bf16.msra.mxu0 %v1461
        %1478 = vmatprep.subr.bf16.mxu0 0
        %1479 = vmatpush1.bf16.msra.mxu0 0
        %1480 = vmatprep.subr.bf16.mxu0 0
        %1481 = vmatpush1.bf16.msra.mxu0 0
        %1482 = vmatprep.subr.bf16.mxu0 0
        %1483 = vmatpush1.bf16.msra.mxu0 0
        %1484 = vmatprep.subr.bf16.mxu0 0
        %1485 = vmatpush1.bf16.msra.mxu0 0
        %1486 = vmatprep.subr.bf16.mxu0 0
        %1487 = vmatpush1.bf16.msra.mxu0 0
        %1488 = vmatprep.subr.bf16.mxu0 0
        %1489 = vmatpush1.bf16.msra.mxu0 0
        %1490 = vmatprep.subr.bf16.mxu0 0
        %1491 = vmatpush1.bf16.msra.mxu0 0
        %1492 = vmatprep.subr.bf16.mxu0 0
        %1493 = vmatpush1.bf16.msra.mxu0 0
        %1494 = vmatprep.subr.bf16.mxu0 0
        %1495 = vmatpush1.bf16.msra.mxu0 0
        %1496 = vmatprep.subr.bf16.mxu0 0
        %1497 = vmatpush1.bf16.msra.mxu0 0
        %1498 = vmatprep.subr.bf16.mxu0 0
        %1499 = vmatpush1.bf16.msra.mxu0 0
        %1500 = vmatprep.subr.bf16.mxu0 0
        %1501 = vmatpush1.bf16.msra.mxu0 0
        %1502 = vmatprep.mubr.bf16.mxu0 0
        %1503 = vmatmul.mubr.bf16.gmra.mrb[0].mxu0 %v1468
        %v1504 = vpop.f32.mrb[0].mxu0
        %v1505 = vadd.f32 0.0, %v1504
        %v1506 = vpop.f32.mrb[0].mxu0
        %v1507 = vpop.f32.mrb[0].mxu0
        %v1508 = vpop.f32.mrb[0].mxu0
        %1509 = vdwg.mxu0
        %v1512 = vunpack.c.l.b16 %v1405
        %v1513 = vunpack.c.l.b16 %v1406
        %v1514 = vrot.slane %v1513, 7
        %v1515 = vsel %vm1439, %v1514, %v1512
        %v1516 = vpack.c.b16 %v1515, %v1515
        %v1525 = vunpack.c.l.b16 %v1407
        %v1526 = vunpack.c.l.b16 %v1408
        %v1527 = vunpack.c.l.b16 %v1409
        %v1528 = vunpack.c.l.b16 %v1410
        %v1529 = vunpack.c.l.b16 %v1411
        %v1530 = vunpack.c.l.b16 %v1412
        %v1531 = vunpack.c.l.b16 %v1413
        %v1532 = vunpack.c.l.b16 %v1414
        %v1533 = vpack.c.b16 %v1526, %v1525
        %v1534 = vpack.c.b16 %v1528, %v1527
        %v1535 = vpack.c.b16 %v1530, %v1529
        %v1536 = vpack.c.b16 %v1532, %v1531
        %v1542 = vsel %vm1466, %v1516, 0
        %1544 = vmatprep.subr.bf16.mxu0 0
        %1545 = vmatpush1.bf16.msra.mxu0 %v1533
        %1546 = vmatprep.subr.bf16.mxu0 0
        %1547 = vmatpush1.bf16.msra.mxu0 %v1534
        %1548 = vmatprep.subr.bf16.mxu0 0
        %1549 = vmatpush1.bf16.msra.mxu0 %v1535
        %1550 = vmatprep.subr.bf16.mxu0 0
        %1551 = vmatpush1.bf16.msra.mxu0 %v1536
        %1552 = vmatprep.subr.bf16.mxu0 0
        %1553 = vmatpush1.bf16.msra.mxu0 0
        %1554 = vmatprep.subr.bf16.mxu0 0
        %1555 = vmatpush1.bf16.msra.mxu0 0
        %1556 = vmatprep.subr.bf16.mxu0 0
        %1557 = vmatpush1.bf16.msra.mxu0 0
        %1558 = vmatprep.subr.bf16.mxu0 0
        %1559 = vmatpush1.bf16.msra.mxu0 0
        %1560 = vmatprep.subr.bf16.mxu0 0
        %1561 = vmatpush1.bf16.msra.mxu0 0
        %1562 = vmatprep.subr.bf16.mxu0 0
        %1563 = vmatpush1.bf16.msra.mxu0 0
        %1564 = vmatprep.subr.bf16.mxu0 0
        %1565 = vmatpush1.bf16.msra.mxu0 0
        %1566 = vmatprep.subr.bf16.mxu0 0
        %1567 = vmatpush1.bf16.msra.mxu0 0
        %1568 = vmatprep.subr.bf16.mxu0 0
        %1569 = vmatpush1.bf16.msra.mxu0 0
        %1570 = vmatprep.subr.bf16.mxu0 0
        %1571 = vmatpush1.bf16.msra.mxu0 0
        %1572 = vmatprep.subr.bf16.mxu0 0
        %1573 = vmatpush1.bf16.msra.mxu0 0
        %1574 = vmatprep.subr.bf16.mxu0 0
        %1575 = vmatpush1.bf16.msra.mxu0 0
        %1576 = vmatprep.mubr.bf16.mxu0 0
        %1577 = vmatmul.mubr.bf16.gmra.mrb[0].mxu0 %v1542
        %v1578 = vpop.f32.mrb[0].mxu0
        %v1579 = vadd.f32 %v1505, %v1578
        %v1580 = vpop.f32.mrb[0].mxu0
        %v1581 = vpop.f32.mrb[0].mxu0
        %v1582 = vpop.f32.mrb[0].mxu0
        %1583 = vdwg.mxu0
        %s1584 = scalar_lea.vmem %s429, 64 [#allocation6]
        %v1585 = vld [vmem:[%s1584] sm:$0xf]
        %v1586 = vld [vmem:[%s1584 + $0x4] sm:$0xf]
        %v1587 = vld [vmem:[%s1584 + $0x8] sm:$0xf]
        %v1588 = vld [vmem:[%s1584 + $0xc] sm:$0xf]
        %v1589 = vld [vmem:[%s1584 + $0x10] sm:$0xf]
        %v1590 = vld [vmem:[%s1584 + $0x14] sm:$0xf]
        %v1591 = vld [vmem:[%s1584 + $0x18] sm:$0xf]
        %v1592 = vld [vmem:[%s1584 + $0x1c] sm:$0xf]
        %v1593 = vrot.slane %v1436, 3
        %v1594 = vrot.slane %v1437, 2
        %v1595 = vsel %vm1439, %v1594, %v1593
        %v1596 = vpack.c.b16 %v1595, %v1595
        %v1605 = vunpack.c.l.b16 %v1585
        %v1606 = vunpack.c.l.b16 %v1586
        %v1607 = vunpack.c.l.b16 %v1587
        %v1608 = vunpack.c.l.b16 %v1588
        %v1609 = vunpack.c.l.b16 %v1589
        %v1610 = vunpack.c.l.b16 %v1590
        %v1611 = vunpack.c.l.b16 %v1591
        %v1612 = vunpack.c.l.b16 %v1592
        %v1613 = vpack.c.b16 %v1606, %v1605
        %v1614 = vpack.c.b16 %v1608, %v1607
        %v1615 = vpack.c.b16 %v1610, %v1609
        %v1616 = vpack.c.b16 %v1612, %v1611
        %v1622 = vsel %vm1466, %v1596, 0
        %1624 = vmatprep.subr.bf16.mxu0 0
        %1625 = vmatpush1.bf16.msra.mxu0 %v1613
        %1626 = vmatprep.subr.bf16.mxu0 0
        %1627 = vmatpush1.bf16.msra.mxu0 %v1614
        %1628 = vmatprep.subr.bf16.mxu0 0
        %1629 = vmatpush1.bf16.msra.mxu0 %v1615
        %1630 = vmatprep.subr.bf16.mxu0 0
        %1631 = vmatpush1.bf16.msra.mxu0 %v1616
        %1632 = vmatprep.subr.bf16.mxu0 0
        %1633 = vmatpush1.bf16.msra.mxu0 0
        %1634 = vmatprep.subr.bf16.mxu0 0
        %1635 = vmatpush1.bf16.msra.mxu0 0
        %1636 = vmatprep.subr.bf16.mxu0 0
        %1637 = vmatpush1.bf16.msra.mxu0 0
        %1638 = vmatprep.subr.bf16.mxu0 0
        %1639 = vmatpush1.bf16.msra.mxu0 0
        %1640 = vmatprep.subr.bf16.mxu0 0
        %1641 = vmatpush1.bf16.msra.mxu0 0
        %1642 = vmatprep.subr.bf16.mxu0 0
        %1643 = vmatpush1.bf16.msra.mxu0 0
        %1644 = vmatprep.subr.bf16.mxu0 0
        %1645 = vmatpush1.bf16.msra.mxu0 0
        %1646 = vmatprep.subr.bf16.mxu0 0
        %1647 = vmatpush1.bf16.msra.mxu0 0
        %1648 = vmatprep.subr.bf16.mxu0 0
        %1649 = vmatpush1.bf16.msra.mxu0 0
        %1650 = vmatprep.subr.bf16.mxu0 0
        %1651 = vmatpush1.bf16.msra.mxu0 0
        %1652 = vmatprep.subr.bf16.mxu0 0
        %1653 = vmatpush1.bf16.msra.mxu0 0
        %1654 = vmatprep.subr.bf16.mxu0 0
        %1655 = vmatpush1.bf16.msra.mxu0 0
        %1656 = vmatprep.mubr.bf16.mxu0 0
        %1657 = vmatmul.mubr.bf16.gmra.mrb[0].mxu0 %v1622
        %v1658 = vpop.f32.mrb[0].mxu0
        %v1659 = vadd.f32 0.0, %v1658
        %v1660 = vpop.f32.mrb[0].mxu0
        %v1661 = vpop.f32.mrb[0].mxu0
        %v1662 = vpop.f32.mrb[0].mxu0
        %1663 = vdwg.mxu0
        %v1664 = vadd.f32 %v1579, %v1659
        %s1665 = scalar_lea.vmem %s429, 96 [#allocation6]
        %v1666 = vld [vmem:[%s1665] sm:$0xf]
        %v1667 = vld [vmem:[%s1665 + $0x4] sm:$0xf]
        %v1668 = vld [vmem:[%s1665 + $0x8] sm:$0xf]
        %v1669 = vld [vmem:[%s1665 + $0xc] sm:$0xf]
        %v1670 = vld [vmem:[%s1665 + $0x10] sm:$0xf]
        %v1671 = vld [vmem:[%s1665 + $0x14] sm:$0xf]
        %v1672 = vld [vmem:[%s1665 + $0x18] sm:$0xf]
        %v1673 = vld [vmem:[%s1665 + $0x1c] sm:$0xf]
        %v1674 = vrot.slane %v1436, 5
        %v1675 = vrot.slane %v1437, 4
        %v1676 = vsel %vm1439, %v1675, %v1674
        %v1677 = vpack.c.b16 %v1676, %v1676
        %v1686 = vunpack.c.l.b16 %v1666
        %v1687 = vunpack.c.l.b16 %v1667
        %v1688 = vunpack.c.l.b16 %v1668
        %v1689 = vunpack.c.l.b16 %v1669
        %v1690 = vunpack.c.l.b16 %v1670
        %v1691 = vunpack.c.l.b16 %v1671
        %v1692 = vunpack.c.l.b16 %v1672
        %v1693 = vunpack.c.l.b16 %v1673
        %v1694 = vpack.c.b16 %v1687, %v1686
        %v1695 = vpack.c.b16 %v1689, %v1688
        %v1696 = vpack.c.b16 %v1691, %v1690
        %v1697 = vpack.c.b16 %v1693, %v1692
        %v1703 = vsel %vm1466, %v1677, 0
        %1705 = vmatprep.subr.bf16.mxu0 0
        %1706 = vmatpush1.bf16.msra.mxu0 %v1694
        %1707 = vmatprep.subr.bf16.mxu0 0
        %1708 = vmatpush1.bf16.msra.mxu0 %v1695
        %1709 = vmatprep.subr.bf16.mxu0 0
        %1710 = vmatpush1.bf16.msra.mxu0 %v1696
        %1711 = vmatprep.subr.bf16.mxu0 0
        %1712 = vmatpush1.bf16.msra.mxu0 %v1697
        %1713 = vmatprep.subr.bf16.mxu0 0
        %1714 = vmatpush1.bf16.msra.mxu0 0
        %1715 = vmatprep.subr.bf16.mxu0 0
        %1716 = vmatpush1.bf16.msra.mxu0 0
        %1717 = vmatprep.subr.bf16.mxu0 0
        %1718 = vmatpush1.bf16.msra.mxu0 0
        %1719 = vmatprep.subr.bf16.mxu0 0
        %1720 = vmatpush1.bf16.msra.mxu0 0
        %1721 = vmatprep.subr.bf16.mxu0 0
        %1722 = vmatpush1.bf16.msra.mxu0 0
        %1723 = vmatprep.subr.bf16.mxu0 0
        %1724 = vmatpush1.bf16.msra.mxu0 0
        %1725 = vmatprep.subr.bf16.mxu0 0
        %1726 = vmatpush1.bf16.msra.mxu0 0
        %1727 = vmatprep.subr.bf16.mxu0 0
        %1728 = vmatpush1.bf16.msra.mxu0 0
        %1729 = vmatprep.subr.bf16.mxu0 0
        %1730 = vmatpush1.bf16.msra.mxu0 0
        %1731 = vmatprep.subr.bf16.mxu0 0
        %1732 = vmatpush1.bf16.msra.mxu0 0
        %1733 = vmatprep.subr.bf16.mxu0 0
        %1734 = vmatpush1.bf16.msra.mxu0 0
        %1735 = vmatprep.subr.bf16.mxu0 0
        %1736 = vmatpush1.bf16.msra.mxu0 0
        %1737 = vmatprep.mubr.bf16.mxu0 0
        %1738 = vmatmul.mubr.bf16.gmra.mrb[0].mxu0 %v1703
        %v1739 = vpop.f32.mrb[0].mxu0
        %v1740 = vadd.f32 0.0, %v1739
        %v1741 = vpop.f32.mrb[0].mxu0
        %v1742 = vpop.f32.mrb[0].mxu0
        %v1743 = vpop.f32.mrb[0].mxu0
        %1744 = vdwg.mxu0
        %v1745 = vadd.f32 %v1664, %v1740
        %v1748 = vrot.slane %v1402, 1
        %v1749 = vrot.slane %v1404, 1
        %v1752 = vmax.f32 %v1401, %v1748
        %v1753 = vmax.f32 %v1403, %v1749
        %v1754 = vpack.c.bf16 %v1752, %v1752
        %v1755 = vpack.c.bf16 %v1753, %v1753
        %s1756 = scalar_lea.vmem %s429, 128 [#allocation6]
        %v1757 = vld [vmem:[%s1756] sm:$0xf]
        %v1758 = vld [vmem:[%s1756 + $0x4] sm:$0xf]
        %v1759 = vld [vmem:[%s1756 + $0x8] sm:$0xf]
        %v1760 = vld [vmem:[%s1756 + $0xc] sm:$0xf]
        %v1761 = vld [vmem:[%s1756 + $0x10] sm:$0xf]
        %v1762 = vld [vmem:[%s1756 + $0x14] sm:$0xf]
        %v1763 = vld [vmem:[%s1756 + $0x18] sm:$0xf]
        %v1764 = vld [vmem:[%s1756 + $0x1c] sm:$0xf]
        %v1767 = vunpack.c.l.b16 %v1754
        %v1768 = vunpack.c.l.b16 %v1755
        %v1769 = vrot.slane %v1767, 7
        %v1770 = vrot.slane %v1768, 6
        %v1771 = vsel %vm1439, %v1770, %v1769
        %v1772 = vpack.c.b16 %v1771, %v1771
        %v1781 = vunpack.c.l.b16 %v1757
        %v1782 = vunpack.c.l.b16 %v1758
        %v1783 = vunpack.c.l.b16 %v1759
        %v1784 = vunpack.c.l.b16 %v1760
        %v1785 = vunpack.c.l.b16 %v1761
        %v1786 = vunpack.c.l.b16 %v1762
        %v1787 = vunpack.c.l.b16 %v1763
        %v1788 = vunpack.c.l.b16 %v1764
        %v1789 = vpack.c.b16 %v1782, %v1781
        %v1790 = vpack.c.b16 %v1784, %v1783
        %v1791 = vpack.c.b16 %v1786, %v1785
        %v1792 = vpack.c.b16 %v1788, %v1787
        %v1798 = vsel %vm1466, %v1772, 0
        %1800 = vmatprep.subr.bf16.mxu0 0
        %1801 = vmatpush1.bf16.msra.mxu0 %v1789
        %1802 = vmatprep.subr.bf16.mxu0 0
        %1803 = vmatpush1.bf16.msra.mxu0 %v1790
        %1804 = vmatprep.subr.bf16.mxu0 0
        %1805 = vmatpush1.bf16.msra.mxu0 %v1791
        %1806 = vmatprep.subr.bf16.mxu0 0
        %1807 = vmatpush1.bf16.msra.mxu0 %v1792
        %1808 = vmatprep.subr.bf16.mxu0 0
        %1809 = vmatpush1.bf16.msra.mxu0 0
        %1810 = vmatprep.subr.bf16.mxu0 0
        %1811 = vmatpush1.bf16.msra.mxu0 0
        %1812 = vmatprep.subr.bf16.mxu0 0
        %1813 = vmatpush1.bf16.msra.mxu0 0
        %1814 = vmatprep.subr.bf16.mxu0 0
        %1815 = vmatpush1.bf16.msra.mxu0 0
        %1816 = vmatprep.subr.bf16.mxu0 0
        %1817 = vmatpush1.bf16.msra.mxu0 0
        %1818 = vmatprep.subr.bf16.mxu0 0
        %1819 = vmatpush1.bf16.msra.mxu0 0
        %1820 = vmatprep.subr.bf16.mxu0 0
        %1821 = vmatpush1.bf16.msra.mxu0 0
        %1822 = vmatprep.subr.bf16.mxu0 0
        %1823 = vmatpush1.bf16.msra.mxu0 0
        %1824 = vmatprep.subr.bf16.mxu0 0
        %1825 = vmatpush1.bf16.msra.mxu0 0
        %1826 = vmatprep.subr.bf16.mxu0 0
        %1827 = vmatpush1.bf16.msra.mxu0 0
        %1828 = vmatprep.subr.bf16.mxu0 0
        %1829 = vmatpush1.bf16.msra.mxu0 0
        %1830 = vmatprep.subr.bf16.mxu0 0
        %1831 = vmatpush1.bf16.msra.mxu0 0
        %1832 = vmatprep.mubr.bf16.mxu0 0
        %1833 = vmatmul.mubr.bf16.gmra.mrb[0].mxu0 %v1798
        %v1834 = vpop.f32.mrb[0].mxu0
        %v1835 = vadd.f32 0.0, %v1834
        %v1836 = vpop.f32.mrb[0].mxu0
        %v1837 = vpop.f32.mrb[0].mxu0
        %v1838 = vpop.f32.mrb[0].mxu0
        %1839 = vdwg.mxu0
        %v1840 = vadd.f32 %v1745, %v1835
        %v1841 = vld [vmem:[#allocation2] sm:$0x3]
        %v1842 = vadd.f32 %v1841, %v1840
        %1843 = vst [vmem:[#allocation2] sm:$0x3] %v1842
        %p1844 = scmp.eq.s32.totalorder %s33, 3
        // Predicated region
        $region73: #{tpu_custom_call.1} parent=59 // pred_check
          %p1845 = pneg %p1844
        $region74: #{tpu_custom_call.1} parent=59 // pred_check_branch
          %1847 = sbr.rel (%p1845) target = $region76
        $region75: #{tpu_custom_call.1} parent=59 // pred_region
          %v1848 = vld [vmem:[#allocation2] sm:$0x3]
          %v1849 = vld [vmem:[%s7] sm:$0x1]
          %v1851 = vlaneseq
          %v1852 = vshrl.u32 %v1851, 7
          %v1853 = vsub.s32 0, %v1852
          %v1854 = vrot.slane %v1849, %v1853
          %v1856 = vadd.f32 %v1848, %v1854
          %v1857 = vmax.f32 %v1856, 0.0
          %v1858 = vld [vmem:[%s8] sm:$0xff]
          %v1859 = vld [vmem:[%s8 + $0x8] sm:$0xff]
          %v1860 = vld [vmem:[%s8 + $0x10] sm:$0xff]
          %v1861 = vld [vmem:[%s8 + $0x18] sm:$0xff]
          %v1862 = vld [vmem:[%s8 + $0x20] sm:$0xff]
          %v1863 = vld [vmem:[%s8 + $0x28] sm:$0xff]
          %v1864 = vld [vmem:[%s8 + $0x30] sm:$0xff]
          %v1865 = vld [vmem:[%s8 + $0x38] sm:$0xff]
          %v1866 = vld [vmem:[%s8 + $0x40] sm:$0xff]
          %v1867 = vld [vmem:[%s8 + $0x48] sm:$0xff]
          %v1868 = vld [vmem:[%s8 + $0x50] sm:$0xff]
          %v1869 = vld [vmem:[%s8 + $0x58] sm:$0xff]
          %v1870 = vld [vmem:[%s8 + $0x60] sm:$0xff]
          %v1871 = vld [vmem:[%s8 + $0x68] sm:$0xff]
          %v1872 = vld [vmem:[%s8 + $0x70] sm:$0xff]
          %v1873 = vld [vmem:[%s8 + $0x78] sm:$0xff]
          %v1874 = vld [vmem:[%s9] sm:$0x1]
          %v1876 = vlaneseq
          %v1877 = vshrl.u32 %v1876, 7
          %v1878 = vsub.s32 0, %v1877
          %v1879 = vrot.slane %v1874, %v1878
          %1881 = vmatprep.subr.mxu0 0.0
          %1882 = vmatpush1.msra.mxu0 %v1858
          %1883 = vmatprep.subr.mxu0 0.0
          %1884 = vmatpush1.msra.mxu0 %v1859
          %1885 = vmatprep.subr.mxu0 0.0
          %1886 = vmatpush1.msra.mxu0 %v1860
          %1887 = vmatprep.subr.mxu0 0.0
          %1888 = vmatpush1.msra.mxu0 %v1861
          %1889 = vmatprep.subr.mxu0 0.0
          %1890 = vmatpush1.msra.mxu0 %v1862
          %1891 = vmatprep.subr.mxu0 0.0
          %1892 = vmatpush1.msra.mxu0 %v1863
          %1893 = vmatprep.subr.mxu0 0.0
          %1894 = vmatpush1.msra.mxu0 %v1864
          %1895 = vmatprep.subr.mxu0 0.0
          %1896 = vmatpush1.msra.mxu0 %v1865
          %1897 = vmatprep.subr.mxu0 0.0
          %1898 = vmatpush1.msra.mxu0 %v1866
          %1899 = vmatprep.subr.mxu0 0.0
          %1900 = vmatpush1.msra.mxu0 %v1867
          %1901 = vmatprep.subr.mxu0 0.0
          %1902 = vmatpush1.msra.mxu0 %v1868
          %1903 = vmatprep.subr.mxu0 0.0
          %1904 = vmatpush1.msra.mxu0 %v1869
          %1905 = vmatprep.subr.mxu0 0.0
          %1906 = vmatpush1.msra.mxu0 %v1870
          %1907 = vmatprep.subr.mxu0 0.0
          %1908 = vmatpush1.msra.mxu0 %v1871
          %1909 = vmatprep.subr.mxu0 0.0
          %1910 = vmatpush1.msra.mxu0 %v1872
          %1911 = vmatprep.subr.mxu0 0.0
          %1912 = vmatpush1.msra.mxu0 %v1873
          %1913 = vmatprep.subr.mxu0 0.0
          %1914 = vmatpush1.msra.mxu0 0.0
          %1915 = vmatprep.subr.mxu0 0.0
          %1916 = vmatpush1.msra.mxu0 0.0
          %1917 = vmatprep.subr.mxu0 0.0
          %1918 = vmatpush1.msra.mxu0 0.0
          %1919 = vmatprep.subr.mxu0 0.0
          %1920 = vmatpush1.msra.mxu0 0.0
          %1921 = vmatprep.subr.mxu0 0.0
          %1922 = vmatpush1.msra.mxu0 0.0
          %1923 = vmatprep.subr.mxu0 0.0
          %1924 = vmatpush1.msra.mxu0 0.0
          %1925 = vmatprep.subr.mxu0 0.0
          %1926 = vmatpush1.msra.mxu0 0.0
          %1927 = vmatprep.subr.mxu0 0.0
          %1928 = vmatpush1.msra.mxu0 0.0
          %1929 = vmatprep.subr.mxu0 0.0
          %1930 = vmatpush1.msra.mxu0 0.0
          %1931 = vmatprep.subr.mxu0 0.0
          %1932 = vmatpush1.msra.mxu0 0.0
          %1933 = vmatprep.subr.mxu0 0.0
          %1934 = vmatpush1.msra.mxu0 0.0
          %1935 = vmatprep.subr.mxu0 0.0
          %1936 = vmatpush1.msra.mxu0 0.0
          %1937 = vmatprep.subr.mxu0 0.0
          %1938 = vmatpush1.msra.mxu0 0.0
          %1939 = vmatprep.subr.mxu0 0.0
          %1940 = vmatpush1.msra.mxu0 0.0
          %1941 = vmatprep.subr.mxu0 0.0
          %1942 = vmatpush1.msra.mxu0 0.0
          %1943 = vmatprep.subr.mxu0 0.0
          %1944 = vmatpush1.msra.mxu0 0.0
          %1945 = vmatprep.mubr.f32.mxu0 0.0
          %1946 = vmatmul.mubr.f32.gmra.mrb[0].mxu0 %v1857
          %v1947 = vpop.f32.mrb[0].mxu0
          %v1948 = vadd.f32 %v1879, %v1947
          %v1949 = vpop.f32.mrb[0].mxu0
          %1950 = vdwg.mxu0
          %vm1951 = vcmask 58368
          %1952 = vst.msk [vmem:[#allocation8] sm:$0x3] %vm1951, %v1948
        $region76: #{tpu_custom_call.1} parent=59 // pred_fallthru
          _
        // Predicated region
        $region77: #{tpu_custom_call.1} parent=59 // pred_check
          %p1953 = pneg %p300
        $region78: #{tpu_custom_call.1} parent=59 // pred_check_branch
          %1955 = sbr.rel (%p1953) target = $region80
        $region79: #{tpu_custom_call.1} parent=59 // pred_region
          %s1957 = ssub.s32 32, 32
          %1958 = vsyncadd [#allocation5], %s1957
          %s1959 = smul.addr %s32, 32
          %s1960 = scalar_lea.hbm %s10, %s1959
          %s1962 = sshll.u32 [#allocation8], 4
          %s1963 = int_to_ptr.vmem [resolvable:$true] %s1962
          %1965 = dma.vmem_to_hbm [thread:$0]  %s1963, 32, %s1960, [#allocation5]
        $region80: #{tpu_custom_call.1} parent=59 // pred_fallthru
          _
        // Predicated region
        $region81: #{tpu_custom_call.1} parent=59 // pred_check
          %p1966 = pneg %p300
        $region82: #{tpu_custom_call.1} parent=59 // pred_check_branch
          %1968 = sbr.rel (%p1966) target = $region84
        $region83: #{tpu_custom_call.1} parent=59 // pred_region
          %1969 = dma.done [#allocation5], 32
        $region84: #{tpu_custom_call.1} parent=59 // pred_fallthru
          _
      $region60: #{tpu_custom_call.1} parent=5 // pred_fallthru
        _
      %p1970 = scmp.le.s32.totalorder 2, %s23
      // Predicated region
      $region85: #{tpu_custom_call.1} parent=5 // pred_check
        %p1971 = pneg %p1970
      $region86: #{tpu_custom_call.1} parent=5 // pred_check_branch
        %1973 = sbr.rel (%p1971) target = $region88
      $region87: #{tpu_custom_call.1} parent=5 // pred_region
        %s1974 = ssub.s32 %s23, 2
      $region88: #{tpu_custom_call.1} parent=5 // pred_fallthru
        _
    $region6: #{tpu_custom_call.1} parent=1 // loop_footer
      %s27 = sadd.s32 1, %s23
    $region7: #{tpu_custom_call.1} parent=1 // loop_footer_branch
      %22 = sbr.rel target = $region3
    $region8: #{tpu_custom_call.1} parent=1 // loop_exit
      _
    %1975 = vsyncpa [#allocation4], 1
    %s1976 = scalar_lea.sflag [#allocation4], 1
    %1977 = vsyncpa %s1976, 1
    %1978 = vsyncpa [#allocation7], 1
    %s1979 = scalar_lea.sflag [#allocation7], 1
    %1980 = vsyncpa %s1979, 1
    %1981 = vsyncpa [#allocation5], 1
    %s1982 = scalar_lea.sflag [#allocation5], 1
    %1983 = vsyncpa %s1982, 1

</llo_original>
